<compile_context>
chip_gen: v6e
topology: v6e:2x2x1
jax: 0.10.0
libtpu: 0.0.40
codegen_flags: <defaults>
</compile_context>

<pallas_src>
import functools

import jax
import jax.numpy as jnp
import numpy as np
from jax.experimental import pallas as pl
from jax.experimental.pallas import tpu as pltpu


# ---------------------------------------------------------------------------
# Pallas kernel
# ---------------------------------------------------------------------------
def _attention_kernel(x_ref, gamma_ref, wq_ref, wkv_ref, qs_ref, ks_ref,
                      wo_ref, o_ref, q_slab, k_slab, v_slab, o_slab, *,
                      heads, dim_head, ln_eps, l2_eps, mxu_dtype,
                      approx_recip):
    # x_ref block: (bt, n, dim)
    xb = x_ref[...].astype(jnp.float32)
    bt, n, dim = xb.shape
    inner_dim = heads * dim_head

    # ---- LayerNorm (F.layer_norm over last dim, learned gamma, beta = 0) ----
    x2 = xb.reshape(bt * n, dim)                             # merge leading dims
    mean = jnp.mean(x2, axis=-1, keepdims=True)
    var = jnp.mean(jnp.square(x2 - mean), axis=-1, keepdims=True)
    xn = (x2 - mean) * jax.lax.rsqrt(var + ln_eps) * gamma_ref[0]   # (bt*n, dim)

    # ---- Q / KV projections: two big MXU matmuls for the whole block --------
    # Weights already arrive in mxu_dtype (pre-cast in the wrapper) -> no
    # per-step casts, half the DMA bytes in the bf16 path.
    xn_m = xn.astype(mxu_dtype)
    q_all = jnp.dot(xn_m, wq_ref[...], preferred_element_type=jnp.float32)
    kv = jnp.dot(xn_m, wkv_ref[...], preferred_element_type=jnp.float32)

    # Park q/k/v in VMEM scratch slabs so per-head intermediates don't keep the
    # full projections live in vregs across the head loop.
    q_slab[...] = q_all                                      # (bt*n, inner)
    k_slab[...] = kv[:, :inner_dim]
    v_slab[...] = kv[:, inner_dim:]

    # q_scale already has the attention scale folded in (done on the host).
    qsv = qs_ref[0]                                          # (dim_head,)
    ksv = ks_ref[0]                                          # (dim_head,)
    eps2 = l2_eps * l2_eps

    # heads is small -> static (unrolled) loop; each head is pure batched
    # matmuls, no in-kernel transposes, and its output goes straight into the
    # lane slot [h*dim_head, (h+1)*dim_head) of the output slab.
    # TODO(synk): for many heads / long sequences, switch to a flash-style
    # (q_tile, kv_tile) grid with an online-softmax accumulator instead of
    # materialising the full (n, n) sim per head.
    # TODO(synk): dim_head=16 uses only a sliver of the 128/256-wide MXU on the
    # QK^T / PV matmuls; at production sizes batch heads into the MXU tile.
    for h in range(heads):
        sl = slice(h * dim_head, (h + 1) * dim_head)
        qh = q_slab[:, sl].reshape(bt, n, dim_head)
        kh = k_slab[:, sl].reshape(bt, n, dim_head)
        vh = v_slab[:, sl].reshape(bt, n, dim_head)

        # l2norm (F.normalize p=2, eps=1e-12) via rsqrt on the EUP.
        qinv = jax.lax.rsqrt(
            jnp.maximum(jnp.sum(qh * qh, axis=-1, keepdims=True), eps2))
        kinv = jax.lax.rsqrt(
            jnp.maximum(jnp.sum(kh * kh, axis=-1, keepdims=True), eps2))
        qh = (qh * qinv * qsv).astype(mxu_dtype)             # scale folded into qsv
        kh = (kh * kinv * ksv).astype(mxu_dtype)

        # sim = (q * scale) @ k^T ; softmax over j (normalisation deferred).
        s = jnp.einsum('bqd,bkd->bqk', qh, kh,
                       preferred_element_type=jnp.float32)    # (bt, n, n) f32
        s_max = jnp.max(s, axis=-1, keepdims=True)
        p = jnp.exp(s - s_max)
        row_sum = jnp.sum(p, axis=-1, keepdims=True)          # (bt, n, 1)

        # PV first, then normalise rows with a reciprocal (EUP) + mul.
        oh = jnp.einsum('bqk,bkd->bqd',
                        p.astype(mxu_dtype), vh.astype(mxu_dtype),
                        preferred_element_type=jnp.float32)   # (bt, n, d)
        oh = oh * pl.reciprocal(row_sum, approx=approx_recip)

        # Write this head directly into its lane slot of the output slab.
        o_slab[:, sl] = oh.reshape(bt * n, dim_head)

    # Single output projection for all heads at once (K = inner_dim).
    out = jnp.dot(o_slab[...].astype(mxu_dtype), wo_ref[...],
                  preferred_element_type=jnp.float32)         # (bt*n, dim)

    # TODO(synk): with dim < 128 this store is lane-sparse (masked vst); at
    # production dim (>=128) it is naturally lane-dense. A (bt, n*dim)
    # presentation would need a last-dim reshape whose Mosaic shape-cast
    # support is not guaranteed, so it is intentionally not done here.
    o_ref[...] = out.reshape(bt, n, dim).astype(o_ref.dtype)


# ---------------------------------------------------------------------------
# Wrapper
# ---------------------------------------------------------------------------
def _default_batch_block(b):
    # Prefer >= 4 grid steps (and at least 2) so BlockSpec double-buffering can
    # overlap DMA with compute and megacore has grid steps to shard.
    target = max(1, b // 4)
    for cand in range(target, 0, -1):
        if b % cand == 0:
            return cand
    return 1


def _vmem_limit_bytes():
    # ~48 MiB on v7x (64 MiB physical), ~96 MiB on v5e/v6e (128 MiB physical).
    try:
        cap = pltpu.get_tpu_info().vmem_capacity_bytes
    except Exception:
        cap = 64 * 1024 * 1024
    return int(min(cap * 3 // 4, 100 * 1024 * 1024))


def attention_pallas(x, params, *, heads, dim_head, scale=8.0,
                     batch_block=None, precise=False):
    """x: (b, n, dim) float32.

    precise=False (default): MXU operands + weights in bf16 (f32 accumulation,
                             f32 elementwise math), EUP approx reciprocal.
    precise=True           : all math in f32, exact reciprocal (verification).
    """
    b, n, dim = x.shape
    inner_dim = heads * dim_head
    bt = _default_batch_block(b) if batch_block is None else batch_block
    assert b % bt == 0, "batch_block must divide batch"

    mxu_dtype = jnp.float32 if precise else jnp.bfloat16

    gamma = params["gamma"].astype(jnp.float32)
    # Pre-cast weights once on the host (halves weight DMA/VMEM in bf16 mode).
    wq = params["wq"].astype(mxu_dtype)
    wkv = params["wkv"].astype(mxu_dtype)
    wo = params["wo"].astype(mxu_dtype)
    # Fold the attention scale into the learned q_scale on the host.
    qs = (params["q_scale"] * scale).astype(jnp.float32)
    ks = params["k_scale"].astype(jnp.float32)

    kernel = functools.partial(
        _attention_kernel,
        heads=heads, dim_head=dim_head,
        ln_eps=1e-5, l2_eps=1e-12,
        mxu_dtype=mxu_dtype,
        approx_recip=not precise,
    )

    # Constant-index operands are single-buffered (Buffered(1)): their block is
    # identical every grid step, so double-buffering would only duplicate VMEM.
    const_spec = lambda shape: pl.BlockSpec(shape, lambda i: tuple(0 for _ in shape),
                                            pipeline_mode=pl.Buffered(1))

    return pl.pallas_call(
        kernel,
        out_shape=jax.ShapeDtypeStruct((b, n, dim), x.dtype),
        grid_spec=pltpu.PrefetchScalarGridSpec(
            num_scalar_prefetch=0,
            grid=(b // bt,),
            in_specs=[
                pl.BlockSpec((bt, n, dim), lambda i: (i, 0, 0)),   # x (pipelined)
                const_spec((1, dim)),                              # gamma
                const_spec((dim, inner_dim)),                      # Wq
                const_spec((dim, 2 * inner_dim)),                  # Wkv
                const_spec((1, dim_head)),                         # q_scale*scale
                const_spec((1, dim_head)),                         # k_scale
                const_spec((inner_dim, dim)),                      # Wo
            ],
            out_specs=pl.BlockSpec((bt, n, dim), lambda i: (i, 0, 0)),
            scratch_shapes=[
                pltpu.VMEM((bt * n, inner_dim), jnp.float32),      # q slab
                pltpu.VMEM((bt * n, inner_dim), jnp.float32),      # k slab
                pltpu.VMEM((bt * n, inner_dim), jnp.float32),      # v slab
                pltpu.VMEM((bt * n, inner_dim), jnp.float32),      # per-head out slab
            ],
        ),
        compiler_params=pltpu.CompilerParams(
            dimension_semantics=("parallel",),
            vmem_limit_bytes=_vmem_limit_bytes()),
    )(x, gamma, wq, wkv, qs, ks, wo)


# ---------------------------------------------------------------------------
# Pure-JAX reference (mirrors the PyTorch forward) for verification
# ---------------------------------------------------------------------------
def attention_ref(x, params, *, heads, dim_head, scale=8.0):
    gamma, wq, wkv, qs, ks, wo = (
        params["gamma"], params["wq"], params["wkv"],
        params["q_scale"], params["k_scale"], params["wo"],
    )
    b, n, dim = x.shape
    inner = heads * dim_head
    mean = jnp.mean(x, -1, keepdims=True)
    var = jnp.mean((x - mean) ** 2, -1, keepdims=True)
    xn = (x - mean) / jnp.sqrt(var + 1e-5) * gamma[0]
    q = xn @ wq
    kv = xn @ wkv
    k, v = kv[..., :inner], kv[..., inner:]

    def split_heads(t):
        return jnp.transpose(t.reshape(b, n, heads, dim_head), (0, 2, 1, 3))

    q, k, v = map(split_heads, (q, k, v))

    def l2norm(t):
        return t / jnp.maximum(jnp.linalg.norm(t, axis=-1, keepdims=True), 1e-12)

    q = l2norm(q) * qs[0]
    k = l2norm(k) * ks[0]
    sim = jnp.einsum("bhid,bhjd->bhij", q, k) * scale
    attn = jax.nn.softmax(sim, axis=-1)
    out = jnp.einsum("bhij,bhjd->bhid", attn, v)
    out = jnp.transpose(out, (0, 2, 1, 3)).reshape(b, n, inner)
    return out @ wo


# ---------------------------------------------------------------------------
# Main
# ---------------------------------------------------------------------------
if __name__ == "__main__":
    batch, seq, dim = 2, 8, 32
    heads, dim_head = 4, 16
    inner_dim = heads * dim_head

    key = jax.random.PRNGKey(0)
    kx, kq, kkv, ko, kg = jax.random.split(key, 5)

    x = jax.random.normal(kx, (batch, seq, dim), dtype=jnp.float32)

    params = {
        # learned LayerNorm gamma (torch init = ones; perturb so the test is meaningful)
        "gamma": (jnp.ones((1, dim), jnp.float32)
                  + 0.1 * jax.random.normal(kg, (1, dim), jnp.float32)),
        "wq": 0.1 * jax.random.normal(kq, (dim, inner_dim), jnp.float32),
        "wkv": 0.1 * jax.random.normal(kkv, (dim, 2 * inner_dim), jnp.float32),
        # q_scale / k_scale init to ones in the module
        "q_scale": jnp.ones((1, dim_head), jnp.float32),
        "k_scale": jnp.ones((1, dim_head), jnp.float32),
        "wo": 0.1 * jax.random.normal(ko, (inner_dim, dim), jnp.float32),
    }

    ref = attention_ref(x, params, heads=heads, dim_head=dim_head, scale=8.0)

    # Exact (f32 MXU) verification path: tight tolerance.
    out_exact = attention_pallas(x, params, heads=heads, dim_head=dim_head,
                                 scale=8.0, precise=True)
    out_exact = jax.block_until_ready(out_exact)
    np.testing.assert_allclose(np.asarray(out_exact), np.asarray(ref),
                               rtol=1e-4, atol=1e-4)

    # Default fast path (bf16 MXU + bf16 weights + approx reciprocal): loose tol.
    out_fast = attention_pallas(x, params, heads=heads, dim_head=dim_head,
                                scale=8.0)
    out_fast = jax.block_until_ready(out_fast)
    np.testing.assert_allclose(np.asarray(out_fast), np.asarray(ref),
                               rtol=5e-2, atol=5e-2)

    # TODO(synk): attn_dropout / output dropout are identity (p=0.0); causal
    # masking, key-padding mask and rel_pos_bias paths are unused in this config.
    print("KERNEL_OK")
</pallas_src>

<mosaic_0001>
module attributes {stable_mosaic.version = 11 : i64} {
  func.func @_attention_kernel(%arg0: i32, %arg1: memref<1x8x32xf32, #tpu.memory_space<vmem>>, %arg2: memref<1x32xf32, #tpu.memory_space<vmem>>, %arg3: memref<32x64xf32, #tpu.memory_space<vmem>>, %arg4: memref<32x128xf32, #tpu.memory_space<vmem>>, %arg5: memref<1x16xf32, #tpu.memory_space<vmem>>, %arg6: memref<1x16xf32, #tpu.memory_space<vmem>>, %arg7: memref<64x32xf32, #tpu.memory_space<vmem>>, %arg8: memref<1x8x32xf32, #tpu.memory_space<vmem>>, %arg9: memref<8x64xf32, #tpu.memory_space<vmem>>, %arg10: memref<8x64xf32, #tpu.memory_space<vmem>>, %arg11: memref<8x64xf32, #tpu.memory_space<vmem>>, %arg12: memref<8x64xf32, #tpu.memory_space<vmem>>) attributes {dimension_semantics = [#tpu.dimension_semantics<parallel>], iteration_bounds = array<i64: 2>, scalar_prefetch = 0 : i64, scratch_operands = 4 : i64, tpu.core_type = #tpu.core_type<tc>, window_params = [{transform_indices = @transform_0, window_bounds = array<i64: 1, 8, 32>}, {pipeline_mode = #tpu.pipeline_mode<synchronous>, transform_indices = @transform_1, window_bounds = array<i64: 1, 32>}, {pipeline_mode = #tpu.pipeline_mode<synchronous>, transform_indices = @transform_2, window_bounds = array<i64: 32, 64>}, {pipeline_mode = #tpu.pipeline_mode<synchronous>, transform_indices = @transform_3, window_bounds = array<i64: 32, 128>}, {pipeline_mode = #tpu.pipeline_mode<synchronous>, transform_indices = @transform_4, window_bounds = array<i64: 1, 16>}, {pipeline_mode = #tpu.pipeline_mode<synchronous>, transform_indices = @transform_5, window_bounds = array<i64: 1, 16>}, {pipeline_mode = #tpu.pipeline_mode<synchronous>, transform_indices = @transform_6, window_bounds = array<i64: 64, 32>}, {transform_indices = @transform_7, window_bounds = array<i64: 1, 8, 32>}]} {
    %c0 = arith.constant 0 : index
    %c0_0 = arith.constant 0 : index
    %c0_1 = arith.constant 0 : index
    %0 = vector.load %arg1[%c0, %c0_0, %c0_1] : memref<1x8x32xf32, #tpu.memory_space<vmem>>, vector<1x8x32xf32>
    %1 = vector.shape_cast %0 : vector<1x8x32xf32> to vector<8x32xf32>
    %cst = arith.constant dense<0.000000e+00> : vector<8xf32>
    %2 = vector.multi_reduction <add>, %1, %cst [1] : vector<8x32xf32> to vector<8xf32>
    %3 = vector.shape_cast %2 : vector<8xf32> to vector<8x1xf32>
    %cst_2 = arith.constant 3.200000e+01 : f32
    %4 = vector.broadcast %cst_2 : f32 to vector<8x1xf32>
    %5 = arith.divf %3, %4 : vector<8x1xf32>
    %6 = vector.broadcast %5 : vector<8x1xf32> to vector<8x32xf32>
    %7 = arith.subf %1, %6 : vector<8x32xf32>
    %8 = arith.mulf %7, %7 : vector<8x32xf32>
    %cst_3 = arith.constant dense<0.000000e+00> : vector<8xf32>
    %9 = vector.multi_reduction <add>, %8, %cst_3 [1] : vector<8x32xf32> to vector<8xf32>
    %10 = vector.shape_cast %9 : vector<8xf32> to vector<8x1xf32>
    %cst_4 = arith.constant 3.200000e+01 : f32
    %11 = vector.broadcast %cst_4 : f32 to vector<8x1xf32>
    %12 = arith.divf %10, %11 : vector<8x1xf32>
    %13 = vector.broadcast %5 : vector<8x1xf32> to vector<8x32xf32>
    %14 = arith.subf %1, %13 : vector<8x32xf32>
    %cst_5 = arith.constant 9.99999974E-6 : f32
    %15 = vector.broadcast %cst_5 : f32 to vector<8x1xf32>
    %16 = arith.addf %12, %15 : vector<8x1xf32>
    %17 = math.rsqrt %16 : vector<8x1xf32>
    %18 = vector.broadcast %17 : vector<8x1xf32> to vector<8x32xf32>
    %19 = arith.mulf %14, %18 : vector<8x32xf32>
    %c0_6 = arith.constant 0 : index
    %c0_7 = arith.constant 0 : index
    %20 = vector.load %arg2[%c0_6, %c0_7] : memref<1x32xf32, #tpu.memory_space<vmem>>, vector<1x32xf32>
    %21 = vector.shape_cast %20 : vector<1x32xf32> to vector<32xf32>
    %22 = vector.shape_cast %21 : vector<32xf32> to vector<1x32xf32>
    %23 = vector.broadcast %22 : vector<1x32xf32> to vector<8x32xf32>
    %24 = arith.mulf %19, %23 : vector<8x32xf32>
    %c0_8 = arith.constant 0 : index
    %c0_9 = arith.constant 0 : index
    %25 = vector.load %arg3[%c0_8, %c0_9] : memref<32x64xf32, #tpu.memory_space<vmem>>, vector<32x64xf32>
    %cst_10 = arith.constant dense<0.000000e+00> : vector<8x64xf32>
    %26 = tpu.matmul %24, %25, %cst_10 {dimension_numbers = #tpu.dot_dimension_numbers<[1], [0], [0], [1], [0, 0, 1, 1], [], []>} : vector<8x32xf32>, vector<32x64xf32>, vector<8x64xf32> -> vector<8x64xf32>
    %c0_11 = arith.constant 0 : index
    %c0_12 = arith.constant 0 : index
    %27 = vector.load %arg4[%c0_11, %c0_12] : memref<32x128xf32, #tpu.memory_space<vmem>>, vector<32x128xf32>
    %cst_13 = arith.constant dense<0.000000e+00> : vector<8x128xf32>
    %28 = tpu.matmul %24, %27, %cst_13 {dimension_numbers = #tpu.dot_dimension_numbers<[1], [0], [0], [1], [0, 0, 1, 1], [], []>} : vector<8x32xf32>, vector<32x128xf32>, vector<8x128xf32> -> vector<8x128xf32>
    %c0_14 = arith.constant 0 : index
    %c0_15 = arith.constant 0 : index
    %29 = vector.load %arg9[%c0_14, %c0_15] : memref<8x64xf32, #tpu.memory_space<vmem>>, vector<8x64xf32>
    tpu.vector_store %arg9[%c0_14, %c0_15], %26 {strides = array<i32>} : memref<8x64xf32, #tpu.memory_space<vmem>>, vector<8x64xf32>,
    %30 = vector.extract_strided_slice %28 {offsets = [0, 0], sizes = [8, 64], strides = [1, 1]} : vector<8x128xf32> to vector<8x64xf32>
    %c0_16 = arith.constant 0 : index
    %c0_17 = arith.constant 0 : index
    %31 = vector.load %arg10[%c0_16, %c0_17] : memref<8x64xf32, #tpu.memory_space<vmem>>, vector<8x64xf32>
    tpu.vector_store %arg10[%c0_16, %c0_17], %30 {strides = array<i32>} : memref<8x64xf32, #tpu.memory_space<vmem>>, vector<8x64xf32>,
    %32 = vector.extract_strided_slice %28 {offsets = [0, 64], sizes = [8, 64], strides = [1, 1]} : vector<8x128xf32> to vector<8x64xf32>
    %c0_18 = arith.constant 0 : index
    %c0_19 = arith.constant 0 : index
    %33 = vector.load %arg11[%c0_18, %c0_19] : memref<8x64xf32, #tpu.memory_space<vmem>>, vector<8x64xf32>
    tpu.vector_store %arg11[%c0_18, %c0_19], %32 {strides = array<i32>} : memref<8x64xf32, #tpu.memory_space<vmem>>, vector<8x64xf32>,
    %c0_20 = arith.constant 0 : index
    %c0_21 = arith.constant 0 : index
    %34 = vector.load %arg5[%c0_20, %c0_21] : memref<1x16xf32, #tpu.memory_space<vmem>>, vector<1x16xf32>
    %35 = vector.shape_cast %34 : vector<1x16xf32> to vector<16xf32>
    %c0_22 = arith.constant 0 : index
    %c0_23 = arith.constant 0 : index
    %36 = vector.load %arg6[%c0_22, %c0_23] : memref<1x16xf32, #tpu.memory_space<vmem>>, vector<1x16xf32>
    %37 = vector.shape_cast %36 : vector<1x16xf32> to vector<16xf32>
    %c0_24 = arith.constant 0 : index
    %c0_25 = arith.constant 0 : index
    %38 = vector.load %arg9[%c0_24, %c0_25] : memref<8x64xf32, #tpu.memory_space<vmem>>, vector<8x16xf32>
    %39 = vector.shape_cast %38 : vector<8x16xf32> to vector<1x8x16xf32>
    %c0_26 = arith.constant 0 : index
    %c0_27 = arith.constant 0 : index
    %40 = vector.load %arg10[%c0_26, %c0_27] : memref<8x64xf32, #tpu.memory_space<vmem>>, vector<8x16xf32>
    %41 = vector.shape_cast %40 : vector<8x16xf32> to vector<1x8x16xf32>
    %c0_28 = arith.constant 0 : index
    %c0_29 = arith.constant 0 : index
    %42 = vector.load %arg11[%c0_28, %c0_29] : memref<8x64xf32, #tpu.memory_space<vmem>>, vector<8x16xf32>
    %43 = vector.shape_cast %42 : vector<8x16xf32> to vector<1x8x16xf32>
    %44 = arith.mulf %39, %39 : vector<1x8x16xf32>
    %cst_30 = arith.constant dense<0.000000e+00> : vector<1x8xf32>
    %45 = vector.multi_reduction <add>, %44, %cst_30 [2] : vector<1x8x16xf32> to vector<1x8xf32>
    %46 = vector.shape_cast %45 : vector<1x8xf32> to vector<1x8x1xf32>
    %cst_31 = arith.constant 1.000000e-24 : f32
    %47 = vector.broadcast %cst_31 : f32 to vector<1x8x1xf32>
    %48 = arith.maximumf %46, %47 : vector<1x8x1xf32>
    %49 = math.rsqrt %48 : vector<1x8x1xf32>
    %50 = arith.mulf %41, %41 : vector<1x8x16xf32>
    %cst_32 = arith.constant dense<0.000000e+00> : vector<1x8xf32>
    %51 = vector.multi_reduction <add>, %50, %cst_32 [2] : vector<1x8x16xf32> to vector<1x8xf32>
    %52 = vector.shape_cast %51 : vector<1x8xf32> to vector<1x8x1xf32>
    %cst_33 = arith.constant 1.000000e-24 : f32
    %53 = vector.broadcast %cst_33 : f32 to vector<1x8x1xf32>
    %54 = arith.maximumf %52, %53 : vector<1x8x1xf32>
    %55 = math.rsqrt %54 : vector<1x8x1xf32>
    %56 = vector.broadcast %49 : vector<1x8x1xf32> to vector<1x8x16xf32>
    %57 = arith.mulf %39, %56 : vector<1x8x16xf32>
    %58 = vector.shape_cast %35 : vector<16xf32> to vector<1x1x16xf32>
    %59 = vector.broadcast %58 : vector<1x1x16xf32> to vector<1x8x16xf32>
    %60 = arith.mulf %57, %59 : vector<1x8x16xf32>
    %61 = vector.broadcast %55 : vector<1x8x1xf32> to vector<1x8x16xf32>
    %62 = arith.mulf %41, %61 : vector<1x8x16xf32>
    %63 = vector.shape_cast %37 : vector<16xf32> to vector<1x1x16xf32>
    %64 = vector.broadcast %63 : vector<1x1x16xf32> to vector<1x8x16xf32>
    %65 = arith.mulf %62, %64 : vector<1x8x16xf32>
    "tpu.trace_start"() <{level = 10 : i32, message = "bqd,bkd->bqk"}> : () -> ()
    %cst_34 = arith.constant dense<0.000000e+00> : vector<1x8x8xf32>
    %66 = tpu.matmul %60, %65, %cst_34 {dimension_numbers = #tpu.dot_dimension_numbers<[2], [2], [1], [1], [0, 0, 0, 1, 1, 1], [0], [0]>} : vector<1x8x16xf32>, vector<1x8x16xf32>, vector<1x8x8xf32> -> vector<1x8x8xf32>
    "tpu.trace_stop"() : () -> ()
    %cst_35 = arith.constant dense<0xFF800000> : vector<1x8xf32>
    %67 = vector.multi_reduction <maximumf>, %66, %cst_35 [2] : vector<1x8x8xf32> to vector<1x8xf32>
    %68 = vector.shape_cast %67 : vector<1x8xf32> to vector<1x8x1xf32>
    %69 = vector.broadcast %68 : vector<1x8x1xf32> to vector<1x8x8xf32>
    %70 = arith.subf %66, %69 : vector<1x8x8xf32>
    %71 = math.exp %70 : vector<1x8x8xf32>
    %cst_36 = arith.constant dense<0.000000e+00> : vector<1x8xf32>
    %72 = vector.multi_reduction <add>, %71, %cst_36 [2] : vector<1x8x8xf32> to vector<1x8xf32>
    %73 = vector.shape_cast %72 : vector<1x8xf32> to vector<1x8x1xf32>
    "tpu.trace_start"() <{level = 10 : i32, message = "bqk,bkd->bqd"}> : () -> ()
    %cst_37 = arith.constant dense<0.000000e+00> : vector<1x8x16xf32>
    %74 = tpu.matmul %71, %43, %cst_37 {dimension_numbers = #tpu.dot_dimension_numbers<[2], [1], [1], [2], [0, 0, 0, 1, 1, 2], [0], [0]>} : vector<1x8x8xf32>, vector<1x8x16xf32>, vector<1x8x16xf32> -> vector<1x8x16xf32>
    "tpu.trace_stop"() : () -> ()
    %75 = tpu.reciprocal %73 : vector<1x8x1xf32> -> vector<1x8x1xf32>
    %76 = vector.broadcast %75 : vector<1x8x1xf32> to vector<1x8x16xf32>
    %77 = arith.mulf %74, %76 : vector<1x8x16xf32>
    %78 = vector.shape_cast %77 : vector<1x8x16xf32> to vector<8x16xf32>
    %c0_38 = arith.constant 0 : index
    %c0_39 = arith.constant 0 : index
    %79 = vector.load %arg12[%c0_38, %c0_39] : memref<8x64xf32, #tpu.memory_space<vmem>>, vector<8x16xf32>
    tpu.vector_store %arg12[%c0_38, %c0_39], %78 {strides = array<i32>} : memref<8x64xf32, #tpu.memory_space<vmem>>, vector<8x16xf32>,
    %c0_40 = arith.constant 0 : index
    %c16 = arith.constant 16 : index
    %80 = vector.load %arg9[%c0_40, %c16] : memref<8x64xf32, #tpu.memory_space<vmem>>, vector<8x16xf32>
    %81 = vector.shape_cast %80 : vector<8x16xf32> to vector<1x8x16xf32>
    %c0_41 = arith.constant 0 : index
    %c16_42 = arith.constant 16 : index
    %82 = vector.load %arg10[%c0_41, %c16_42] : memref<8x64xf32, #tpu.memory_space<vmem>>, vector<8x16xf32>
    %83 = vector.shape_cast %82 : vector<8x16xf32> to vector<1x8x16xf32>
    %c0_43 = arith.constant 0 : index
    %c16_44 = arith.constant 16 : index
    %84 = vector.load %arg11[%c0_43, %c16_44] : memref<8x64xf32, #tpu.memory_space<vmem>>, vector<8x16xf32>
    %85 = vector.shape_cast %84 : vector<8x16xf32> to vector<1x8x16xf32>
    %86 = arith.mulf %81, %81 : vector<1x8x16xf32>
    %cst_45 = arith.constant dense<0.000000e+00> : vector<1x8xf32>
    %87 = vector.multi_reduction <add>, %86, %cst_45 [2] : vector<1x8x16xf32> to vector<1x8xf32>
    %88 = vector.shape_cast %87 : vector<1x8xf32> to vector<1x8x1xf32>
    %cst_46 = arith.constant 1.000000e-24 : f32
    %89 = vector.broadcast %cst_46 : f32 to vector<1x8x1xf32>
    %90 = arith.maximumf %88, %89 : vector<1x8x1xf32>
    %91 = math.rsqrt %90 : vector<1x8x1xf32>
    %92 = arith.mulf %83, %83 : vector<1x8x16xf32>
    %cst_47 = arith.constant dense<0.000000e+00> : vector<1x8xf32>
    %93 = vector.multi_reduction <add>, %92, %cst_47 [2] : vector<1x8x16xf32> to vector<1x8xf32>
    %94 = vector.shape_cast %93 : vector<1x8xf32> to vector<1x8x1xf32>
    %cst_48 = arith.constant 1.000000e-24 : f32
    %95 = vector.broadcast %cst_48 : f32 to vector<1x8x1xf32>
    %96 = arith.maximumf %94, %95 : vector<1x8x1xf32>
    %97 = math.rsqrt %96 : vector<1x8x1xf32>
    %98 = vector.broadcast %91 : vector<1x8x1xf32> to vector<1x8x16xf32>
    %99 = arith.mulf %81, %98 : vector<1x8x16xf32>
    %100 = vector.shape_cast %35 : vector<16xf32> to vector<1x1x16xf32>
    %101 = vector.broadcast %100 : vector<1x1x16xf32> to vector<1x8x16xf32>
    %102 = arith.mulf %99, %101 : vector<1x8x16xf32>
    %103 = vector.broadcast %97 : vector<1x8x1xf32> to vector<1x8x16xf32>
    %104 = arith.mulf %83, %103 : vector<1x8x16xf32>
    %105 = vector.shape_cast %37 : vector<16xf32> to vector<1x1x16xf32>
    %106 = vector.broadcast %105 : vector<1x1x16xf32> to vector<1x8x16xf32>
    %107 = arith.mulf %104, %106 : vector<1x8x16xf32>
    "tpu.trace_start"() <{level = 10 : i32, message = "bqd,bkd->bqk"}> : () -> ()
    %cst_49 = arith.constant dense<0.000000e+00> : vector<1x8x8xf32>
    %108 = tpu.matmul %102, %107, %cst_49 {dimension_numbers = #tpu.dot_dimension_numbers<[2], [2], [1], [1], [0, 0, 0, 1, 1, 1], [0], [0]>} : vector<1x8x16xf32>, vector<1x8x16xf32>, vector<1x8x8xf32> -> vector<1x8x8xf32>
    "tpu.trace_stop"() : () -> ()
    %cst_50 = arith.constant dense<0xFF800000> : vector<1x8xf32>
    %109 = vector.multi_reduction <maximumf>, %108, %cst_50 [2] : vector<1x8x8xf32> to vector<1x8xf32>
    %110 = vector.shape_cast %109 : vector<1x8xf32> to vector<1x8x1xf32>
    %111 = vector.broadcast %110 : vector<1x8x1xf32> to vector<1x8x8xf32>
    %112 = arith.subf %108, %111 : vector<1x8x8xf32>
    %113 = math.exp %112 : vector<1x8x8xf32>
    %cst_51 = arith.constant dense<0.000000e+00> : vector<1x8xf32>
    %114 = vector.multi_reduction <add>, %113, %cst_51 [2] : vector<1x8x8xf32> to vector<1x8xf32>
    %115 = vector.shape_cast %114 : vector<1x8xf32> to vector<1x8x1xf32>
    "tpu.trace_start"() <{level = 10 : i32, message = "bqk,bkd->bqd"}> : () -> ()
    %cst_52 = arith.constant dense<0.000000e+00> : vector<1x8x16xf32>
    %116 = tpu.matmul %113, %85, %cst_52 {dimension_numbers = #tpu.dot_dimension_numbers<[2], [1], [1], [2], [0, 0, 0, 1, 1, 2], [0], [0]>} : vector<1x8x8xf32>, vector<1x8x16xf32>, vector<1x8x16xf32> -> vector<1x8x16xf32>
    "tpu.trace_stop"() : () -> ()
    %117 = tpu.reciprocal %115 : vector<1x8x1xf32> -> vector<1x8x1xf32>
    %118 = vector.broadcast %117 : vector<1x8x1xf32> to vector<1x8x16xf32>
    %119 = arith.mulf %116, %118 : vector<1x8x16xf32>
    %120 = vector.shape_cast %119 : vector<1x8x16xf32> to vector<8x16xf32>
    %c0_53 = arith.constant 0 : index
    %c16_54 = arith.constant 16 : index
    %121 = vector.load %arg12[%c0_53, %c16_54] : memref<8x64xf32, #tpu.memory_space<vmem>>, vector<8x16xf32>
    tpu.vector_store %arg12[%c0_53, %c16_54], %120 {strides = array<i32>} : memref<8x64xf32, #tpu.memory_space<vmem>>, vector<8x16xf32>,
    %c0_55 = arith.constant 0 : index
    %c32 = arith.constant 32 : index
    %122 = vector.load %arg9[%c0_55, %c32] : memref<8x64xf32, #tpu.memory_space<vmem>>, vector<8x16xf32>
    %123 = vector.shape_cast %122 : vector<8x16xf32> to vector<1x8x16xf32>
    %c0_56 = arith.constant 0 : index
    %c32_57 = arith.constant 32 : index
    %124 = vector.load %arg10[%c0_56, %c32_57] : memref<8x64xf32, #tpu.memory_space<vmem>>, vector<8x16xf32>
    %125 = vector.shape_cast %124 : vector<8x16xf32> to vector<1x8x16xf32>
    %c0_58 = arith.constant 0 : index
    %c32_59 = arith.constant 32 : index
    %126 = vector.load %arg11[%c0_58, %c32_59] : memref<8x64xf32, #tpu.memory_space<vmem>>, vector<8x16xf32>
    %127 = vector.shape_cast %126 : vector<8x16xf32> to vector<1x8x16xf32>
    %128 = arith.mulf %123, %123 : vector<1x8x16xf32>
    %cst_60 = arith.constant dense<0.000000e+00> : vector<1x8xf32>
    %129 = vector.multi_reduction <add>, %128, %cst_60 [2] : vector<1x8x16xf32> to vector<1x8xf32>
    %130 = vector.shape_cast %129 : vector<1x8xf32> to vector<1x8x1xf32>
    %cst_61 = arith.constant 1.000000e-24 : f32
    %131 = vector.broadcast %cst_61 : f32 to vector<1x8x1xf32>
    %132 = arith.maximumf %130, %131 : vector<1x8x1xf32>
    %133 = math.rsqrt %132 : vector<1x8x1xf32>
    %134 = arith.mulf %125, %125 : vector<1x8x16xf32>
    %cst_62 = arith.constant dense<0.000000e+00> : vector<1x8xf32>
    %135 = vector.multi_reduction <add>, %134, %cst_62 [2] : vector<1x8x16xf32> to vector<1x8xf32>
    %136 = vector.shape_cast %135 : vector<1x8xf32> to vector<1x8x1xf32>
    %cst_63 = arith.constant 1.000000e-24 : f32
    %137 = vector.broadcast %cst_63 : f32 to vector<1x8x1xf32>
    %138 = arith.maximumf %136, %137 : vector<1x8x1xf32>
    %139 = math.rsqrt %138 : vector<1x8x1xf32>
    %140 = vector.broadcast %133 : vector<1x8x1xf32> to vector<1x8x16xf32>
    %141 = arith.mulf %123, %140 : vector<1x8x16xf32>
    %142 = vector.shape_cast %35 : vector<16xf32> to vector<1x1x16xf32>
    %143 = vector.broadcast %142 : vector<1x1x16xf32> to vector<1x8x16xf32>
    %144 = arith.mulf %141, %143 : vector<1x8x16xf32>
    %145 = vector.broadcast %139 : vector<1x8x1xf32> to vector<1x8x16xf32>
    %146 = arith.mulf %125, %145 : vector<1x8x16xf32>
    %147 = vector.shape_cast %37 : vector<16xf32> to vector<1x1x16xf32>
    %148 = vector.broadcast %147 : vector<1x1x16xf32> to vector<1x8x16xf32>
    %149 = arith.mulf %146, %148 : vector<1x8x16xf32>
    "tpu.trace_start"() <{level = 10 : i32, message = "bqd,bkd->bqk"}> : () -> ()
    %cst_64 = arith.constant dense<0.000000e+00> : vector<1x8x8xf32>
    %150 = tpu.matmul %144, %149, %cst_64 {dimension_numbers = #tpu.dot_dimension_numbers<[2], [2], [1], [1], [0, 0, 0, 1, 1, 1], [0], [0]>} : vector<1x8x16xf32>, vector<1x8x16xf32>, vector<1x8x8xf32> -> vector<1x8x8xf32>
    "tpu.trace_stop"() : () -> ()
    %cst_65 = arith.constant dense<0xFF800000> : vector<1x8xf32>
    %151 = vector.multi_reduction <maximumf>, %150, %cst_65 [2] : vector<1x8x8xf32> to vector<1x8xf32>
    %152 = vector.shape_cast %151 : vector<1x8xf32> to vector<1x8x1xf32>
    %153 = vector.broadcast %152 : vector<1x8x1xf32> to vector<1x8x8xf32>
    %154 = arith.subf %150, %153 : vector<1x8x8xf32>
    %155 = math.exp %154 : vector<1x8x8xf32>
    %cst_66 = arith.constant dense<0.000000e+00> : vector<1x8xf32>
    %156 = vector.multi_reduction <add>, %155, %cst_66 [2] : vector<1x8x8xf32> to vector<1x8xf32>
    %157 = vector.shape_cast %156 : vector<1x8xf32> to vector<1x8x1xf32>
    "tpu.trace_start"() <{level = 10 : i32, message = "bqk,bkd->bqd"}> : () -> ()
    %cst_67 = arith.constant dense<0.000000e+00> : vector<1x8x16xf32>
    %158 = tpu.matmul %155, %127, %cst_67 {dimension_numbers = #tpu.dot_dimension_numbers<[2], [1], [1], [2], [0, 0, 0, 1, 1, 2], [0], [0]>} : vector<1x8x8xf32>, vector<1x8x16xf32>, vector<1x8x16xf32> -> vector<1x8x16xf32>
    "tpu.trace_stop"() : () -> ()
    %159 = tpu.reciprocal %157 : vector<1x8x1xf32> -> vector<1x8x1xf32>
    %160 = vector.broadcast %159 : vector<1x8x1xf32> to vector<1x8x16xf32>
    %161 = arith.mulf %158, %160 : vector<1x8x16xf32>
    %162 = vector.shape_cast %161 : vector<1x8x16xf32> to vector<8x16xf32>
    %c0_68 = arith.constant 0 : index
    %c32_69 = arith.constant 32 : index
    %163 = vector.load %arg12[%c0_68, %c32_69] : memref<8x64xf32, #tpu.memory_space<vmem>>, vector<8x16xf32>
    tpu.vector_store %arg12[%c0_68, %c32_69], %162 {strides = array<i32>} : memref<8x64xf32, #tpu.memory_space<vmem>>, vector<8x16xf32>,
    %c0_70 = arith.constant 0 : index
    %c48 = arith.constant 48 : index
    %164 = vector.load %arg9[%c0_70, %c48] : memref<8x64xf32, #tpu.memory_space<vmem>>, vector<8x16xf32>
    %165 = vector.shape_cast %164 : vector<8x16xf32> to vector<1x8x16xf32>
    %c0_71 = arith.constant 0 : index
    %c48_72 = arith.constant 48 : index
    %166 = vector.load %arg10[%c0_71, %c48_72] : memref<8x64xf32, #tpu.memory_space<vmem>>, vector<8x16xf32>
    %167 = vector.shape_cast %166 : vector<8x16xf32> to vector<1x8x16xf32>
    %c0_73 = arith.constant 0 : index
    %c48_74 = arith.constant 48 : index
    %168 = vector.load %arg11[%c0_73, %c48_74] : memref<8x64xf32, #tpu.memory_space<vmem>>, vector<8x16xf32>
    %169 = vector.shape_cast %168 : vector<8x16xf32> to vector<1x8x16xf32>
    %170 = arith.mulf %165, %165 : vector<1x8x16xf32>
    %cst_75 = arith.constant dense<0.000000e+00> : vector<1x8xf32>
    %171 = vector.multi_reduction <add>, %170, %cst_75 [2] : vector<1x8x16xf32> to vector<1x8xf32>
    %172 = vector.shape_cast %171 : vector<1x8xf32> to vector<1x8x1xf32>
    %cst_76 = arith.constant 1.000000e-24 : f32
    %173 = vector.broadcast %cst_76 : f32 to vector<1x8x1xf32>
    %174 = arith.maximumf %172, %173 : vector<1x8x1xf32>
    %175 = math.rsqrt %174 : vector<1x8x1xf32>
    %176 = arith.mulf %167, %167 : vector<1x8x16xf32>
    %cst_77 = arith.constant dense<0.000000e+00> : vector<1x8xf32>
    %177 = vector.multi_reduction <add>, %176, %cst_77 [2] : vector<1x8x16xf32> to vector<1x8xf32>
    %178 = vector.shape_cast %177 : vector<1x8xf32> to vector<1x8x1xf32>
    %cst_78 = arith.constant 1.000000e-24 : f32
    %179 = vector.broadcast %cst_78 : f32 to vector<1x8x1xf32>
    %180 = arith.maximumf %178, %179 : vector<1x8x1xf32>
    %181 = math.rsqrt %180 : vector<1x8x1xf32>
    %182 = vector.broadcast %175 : vector<1x8x1xf32> to vector<1x8x16xf32>
    %183 = arith.mulf %165, %182 : vector<1x8x16xf32>
    %184 = vector.shape_cast %35 : vector<16xf32> to vector<1x1x16xf32>
    %185 = vector.broadcast %184 : vector<1x1x16xf32> to vector<1x8x16xf32>
    %186 = arith.mulf %183, %185 : vector<1x8x16xf32>
    %187 = vector.broadcast %181 : vector<1x8x1xf32> to vector<1x8x16xf32>
    %188 = arith.mulf %167, %187 : vector<1x8x16xf32>
    %189 = vector.shape_cast %37 : vector<16xf32> to vector<1x1x16xf32>
    %190 = vector.broadcast %189 : vector<1x1x16xf32> to vector<1x8x16xf32>
    %191 = arith.mulf %188, %190 : vector<1x8x16xf32>
    "tpu.trace_start"() <{level = 10 : i32, message = "bqd,bkd->bqk"}> : () -> ()
    %cst_79 = arith.constant dense<0.000000e+00> : vector<1x8x8xf32>
    %192 = tpu.matmul %186, %191, %cst_79 {dimension_numbers = #tpu.dot_dimension_numbers<[2], [2], [1], [1], [0, 0, 0, 1, 1, 1], [0], [0]>} : vector<1x8x16xf32>, vector<1x8x16xf32>, vector<1x8x8xf32> -> vector<1x8x8xf32>
    "tpu.trace_stop"() : () -> ()
    %cst_80 = arith.constant dense<0xFF800000> : vector<1x8xf32>
    %193 = vector.multi_reduction <maximumf>, %192, %cst_80 [2] : vector<1x8x8xf32> to vector<1x8xf32>
    %194 = vector.shape_cast %193 : vector<1x8xf32> to vector<1x8x1xf32>
    %195 = vector.broadcast %194 : vector<1x8x1xf32> to vector<1x8x8xf32>
    %196 = arith.subf %192, %195 : vector<1x8x8xf32>
    %197 = math.exp %196 : vector<1x8x8xf32>
    %cst_81 = arith.constant dense<0.000000e+00> : vector<1x8xf32>
    %198 = vector.multi_reduction <add>, %197, %cst_81 [2] : vector<1x8x8xf32> to vector<1x8xf32>
    %199 = vector.shape_cast %198 : vector<1x8xf32> to vector<1x8x1xf32>
    "tpu.trace_start"() <{level = 10 : i32, message = "bqk,bkd->bqd"}> : () -> ()
    %cst_82 = arith.constant dense<0.000000e+00> : vector<1x8x16xf32>
    %200 = tpu.matmul %197, %169, %cst_82 {dimension_numbers = #tpu.dot_dimension_numbers<[2], [1], [1], [2], [0, 0, 0, 1, 1, 2], [0], [0]>} : vector<1x8x8xf32>, vector<1x8x16xf32>, vector<1x8x16xf32> -> vector<1x8x16xf32>
    "tpu.trace_stop"() : () -> ()
    %201 = tpu.reciprocal %199 : vector<1x8x1xf32> -> vector<1x8x1xf32>
    %202 = vector.broadcast %201 : vector<1x8x1xf32> to vector<1x8x16xf32>
    %203 = arith.mulf %200, %202 : vector<1x8x16xf32>
    %204 = vector.shape_cast %203 : vector<1x8x16xf32> to vector<8x16xf32>
    %c0_83 = arith.constant 0 : index
    %c48_84 = arith.constant 48 : index
    %205 = vector.load %arg12[%c0_83, %c48_84] : memref<8x64xf32, #tpu.memory_space<vmem>>, vector<8x16xf32>
    tpu.vector_store %arg12[%c0_83, %c48_84], %204 {strides = array<i32>} : memref<8x64xf32, #tpu.memory_space<vmem>>, vector<8x16xf32>,
    %c0_85 = arith.constant 0 : index
    %c0_86 = arith.constant 0 : index
    %206 = vector.load %arg12[%c0_85, %c0_86] : memref<8x64xf32, #tpu.memory_space<vmem>>, vector<8x64xf32>
    %c0_87 = arith.constant 0 : index
    %c0_88 = arith.constant 0 : index
    %207 = vector.load %arg7[%c0_87, %c0_88] : memref<64x32xf32, #tpu.memory_space<vmem>>, vector<64x32xf32>
    %cst_89 = arith.constant dense<0.000000e+00> : vector<8x32xf32>
    %208 = tpu.matmul %206, %207, %cst_89 {dimension_numbers = #tpu.dot_dimension_numbers<[1], [0], [0], [1], [0, 0, 1, 1], [], []>} : vector<8x64xf32>, vector<64x32xf32>, vector<8x32xf32> -> vector<8x32xf32>
    %209 = vector.shape_cast %208 : vector<8x32xf32> to vector<1x8x32xf32>
    %c0_90 = arith.constant 0 : index
    %c0_91 = arith.constant 0 : index
    %c0_92 = arith.constant 0 : index
    %210 = vector.load %arg8[%c0_90, %c0_91, %c0_92] : memref<1x8x32xf32, #tpu.memory_space<vmem>>, vector<1x8x32xf32>
    tpu.vector_store %arg8[%c0_90, %c0_91, %c0_92], %209 {strides = array<i32>} : memref<1x8x32xf32, #tpu.memory_space<vmem>>, vector<1x8x32xf32>,
    return
  }
  func.func @transform_0(%arg0: i32) -> (i32, i32, i32) {
    %c0_i32 = arith.constant 0 : i32
    %c0_i32_0 = arith.constant 0 : i32
    %c0_i32_1 = arith.constant 0 : i32
    return %arg0, %c0_i32, %c0_i32_0 : i32, i32, i32
  }
  func.func @transform_1(%arg0: i32) -> (i32, i32) {
    %c0_i32 = arith.constant 0 : i32
    %c0_i32_0 = arith.constant 0 : i32
    %c0_i32_1 = arith.constant 0 : i32
    return %c0_i32, %c0_i32_0 : i32, i32
  }
  func.func @transform_2(%arg0: i32) -> (i32, i32) {
    %c0_i32 = arith.constant 0 : i32
    %c0_i32_0 = arith.constant 0 : i32
    %c0_i32_1 = arith.constant 0 : i32
    return %c0_i32, %c0_i32_0 : i32, i32
  }
  func.func @transform_3(%arg0: i32) -> (i32, i32) {
    %c0_i32 = arith.constant 0 : i32
    %c0_i32_0 = arith.constant 0 : i32
    %c0_i32_1 = arith.constant 0 : i32
    return %c0_i32, %c0_i32_0 : i32, i32
  }
  func.func @transform_4(%arg0: i32) -> (i32, i32) {
    %c0_i32 = arith.constant 0 : i32
    %c0_i32_0 = arith.constant 0 : i32
    %c0_i32_1 = arith.constant 0 : i32
    return %c0_i32, %c0_i32_0 : i32, i32
  }
  func.func @transform_5(%arg0: i32) -> (i32, i32) {
    %c0_i32 = arith.constant 0 : i32
    %c0_i32_0 = arith.constant 0 : i32
    %c0_i32_1 = arith.constant 0 : i32
    return %c0_i32, %c0_i32_0 : i32, i32
  }
  func.func @transform_6(%arg0: i32) -> (i32, i32) {
    %c0_i32 = arith.constant 0 : i32
    %c0_i32_0 = arith.constant 0 : i32
    %c0_i32_1 = arith.constant 0 : i32
    return %c0_i32, %c0_i32_0 : i32, i32
  }
  func.func @transform_7(%arg0: i32) -> (i32, i32, i32) {
    %c0_i32 = arith.constant 0 : i32
    %c0_i32_0 = arith.constant 0 : i32
    %c0_i32_1 = arith.constant 0 : i32
    return %arg0, %c0_i32, %c0_i32_0 : i32, i32, i32
  }
}

</mosaic_0001>

<llo_original>
// kernel: tpu_custom_call.1
$region0: #{tpu_custom_call.1}
  #allocation0 [shape = 'u32[]', space=smem, size = 0x4, offset = 0x4, fixed_abs, tag = 'smem constant byte address 0x4 - core index']
  #allocation1 [shape = 'u32[144,128]{1,0:T(1,128)}', space=vmem, size = 0x12000, scoped, tag = 'internal scratch']
  #allocation2 [shape = 'f32[8,64]{1,0:T(8,128)}', space=vmem, size = 0x1000, scoped, tag = 'scratch operand']
  #allocation3 [shape = 'f32[8,64]{1,0:T(8,128)}', space=vmem, size = 0x1000, scoped, tag = 'scratch operand']
  #allocation4 [shape = 'f32[8,64]{1,0:T(8,128)}', space=vmem, size = 0x1000, scoped, tag = 'scratch operand']
  #allocation5 [shape = 'f32[8,64]{1,0:T(8,128)}', space=vmem, size = 0x1000, scoped, tag = 'scratch operand']
  %s0 = inlined_call_operand.vmem [shape: f32[2,8,32], index: 0, kind: input, shape index: {}]
  %s1 = inlined_call_operand.vmem [shape: f32[1,32], index: 1, kind: input, shape index: {}]
  %s2 = inlined_call_operand.vmem [shape: f32[32,64], index: 2, kind: input, shape index: {}]
  %s3 = inlined_call_operand.vmem [shape: f32[32,128], index: 3, kind: input, shape index: {}]
  %s4 = inlined_call_operand.vmem [shape: f32[1,16], index: 4, kind: input, shape index: {}]
  %s5 = inlined_call_operand.vmem [shape: f32[1,16], index: 5, kind: input, shape index: {}]
  %s6 = inlined_call_operand.vmem [shape: f32[64,32], index: 6, kind: input, shape index: {}]
  %s7 = inlined_call_operand.hbm [shape: f32[2,8,32], index: 7, kind: output, shape index: {}]
  %s8 = sld [smem:[#allocation0]]
  $region61: #{tpu_custom_call.1} parent=0
    _
  %s10 = ssub.s32 1, %s8
  %s11 = scalar_select 0, %s10, %s8
  $region1: #{tpu_custom_call.1} parent=0
    #allocation6 [shape = 'u8[8192]{0}', space=vmem, size = 0x2000, scoped, tag = 'output window, operand 0']
    #allocation7 [shape = 's32[2]{0}', space=sflag, size = 0x8, scoped, tag = 'scoped memory for tpu_custom_call.1']
    %12 = vsyncpa [#allocation7], 0
    %s13 = scalar_lea.sflag [#allocation7], 1
    %14 = vsyncpa %s13, 0
    loop: start=0, step=1, limit=4
    $region2: #{tpu_custom_call.1} parent=1 // loop_pre_header
      _
    $region3: #{tpu_custom_call.1} parent=1 // loop_header
      %s16 = sphi 0, %s20
      %p17 = scmp.ge.s32.totalorder %s16, 4
      %s26 = sphi 0, %s28
      %s29 = sphi 0, %s26
      %s30 = sphi 0, %s29
      %s46 = sphi 0, %s30
      %s50 = sphi 0, %s50
      %s52 = sphi 0, %s50
      %s53 = sphi 0, %s52
      %s67 = sphi 0, %s53
      %s71 = sphi 0, %s71
      %s73 = sphi 0, %s71
      %s74 = sphi 0, %s73
      %s88 = sphi 0, %s74
      %s92 = sphi 0, %s92
      %s94 = sphi 0, %s92
      %s95 = sphi 0, %s94
      %s109 = sphi 0, %s95
      %s113 = sphi 0, %s113
      %s115 = sphi 0, %s113
      %s116 = sphi 0, %s115
      %s130 = sphi 0, %s116
      %s134 = sphi 0, %s134
      %s136 = sphi 0, %s134
      %s137 = sphi 0, %s136
      %s151 = sphi 0, %s137
      %s155 = sphi 0, %s155
      %s157 = sphi 0, %s155
      %s158 = sphi 0, %s157
      %s172 = sphi 0, %s158
      %s178 = sphi 0, %s180
      %s181 = sphi 0, %s178
      %s182 = sphi 0, %s181
      %s198 = sphi 0, %s182
    $region4: #{tpu_custom_call.1} parent=1 // loop_header_branch
      %19 = sbr.rel (%p17) target = $region8
    $region5: #{tpu_custom_call.1} parent=1 // loop_body
      %s21 = ssub.s32 %s16, 1
      %s22 = ssub.s32 %s16, 2
      %s23 = sadd.s32 %s16, 1
      %s24 = ssub.s32 %s16, %s23
      %p25 = scmp.eq.s32.totalorder %s24, 0
      %s27 = sadd.s32 %s26, 1
      %s28 = scalar_select %p25, %s26, %s27
      %p31 = pneg %p25
      %p32 = scmp.eq.s32.totalorder %s16, 1
      %p33 = por %p31, %p32
      %p34 = scmp.ne.s32.totalorder %s26, %s29
      %p35 = scmp.eq.s32.totalorder %s16, 0
      %p36 = por %p34, %p35
      %p37 = scmp.ne.s32.totalorder %s26, %s29
      %p38 = scmp.eq.s32.totalorder %s21, 1
      %p39 = por %p37, %p38
      %p40 = scmp.ne.s32.totalorder %s29, %s30
      %p41 = scmp.eq.s32.totalorder %s21, 0
      %p42 = por %p40, %p41
      %p43 = scmp.ne.s32.totalorder %s29, %s30
      %p44 = scmp.eq.s32.totalorder %s22, 1
      %p45 = por %p43, %p44
      %p47 = scmp.ne.s32.totalorder %s30, %s46
      %p48 = scmp.eq.s32.totalorder %s22, 0
      %p49 = por %p47, %p48
      %s51 = sadd.s32 %s50, 1
      %p54 = scmp.eq.s32.totalorder %s16, 1
      %p55 = scmp.ne.s32.totalorder %s50, %s52
      %p56 = scmp.eq.s32.totalorder %s16, 0
      %p57 = por %p55, %p56
      %p58 = scmp.ne.s32.totalorder %s50, %s52
      %p59 = scmp.eq.s32.totalorder %s21, 1
      %p60 = por %p58, %p59
      %p61 = scmp.ne.s32.totalorder %s52, %s53
      %p62 = scmp.eq.s32.totalorder %s21, 0
      %p63 = por %p61, %p62
      %p64 = scmp.ne.s32.totalorder %s52, %s53
      %p65 = scmp.eq.s32.totalorder %s22, 1
      %p66 = por %p64, %p65
      %p68 = scmp.ne.s32.totalorder %s53, %s67
      %p69 = scmp.eq.s32.totalorder %s22, 0
      %p70 = por %p68, %p69
      %s72 = sadd.s32 %s71, 1
      %p75 = scmp.eq.s32.totalorder %s16, 1
      %p76 = scmp.ne.s32.totalorder %s71, %s73
      %p77 = scmp.eq.s32.totalorder %s16, 0
      %p78 = por %p76, %p77
      %p79 = scmp.ne.s32.totalorder %s71, %s73
      %p80 = scmp.eq.s32.totalorder %s21, 1
      %p81 = por %p79, %p80
      %p82 = scmp.ne.s32.totalorder %s73, %s74
      %p83 = scmp.eq.s32.totalorder %s21, 0
      %p84 = por %p82, %p83
      %p85 = scmp.ne.s32.totalorder %s73, %s74
      %p86 = scmp.eq.s32.totalorder %s22, 1
      %p87 = por %p85, %p86
      %p89 = scmp.ne.s32.totalorder %s74, %s88
      %p90 = scmp.eq.s32.totalorder %s22, 0
      %p91 = por %p89, %p90
      %s93 = sadd.s32 %s92, 1
      %p96 = scmp.eq.s32.totalorder %s16, 1
      %p97 = scmp.ne.s32.totalorder %s92, %s94
      %p98 = scmp.eq.s32.totalorder %s16, 0
      %p99 = por %p97, %p98
      %p100 = scmp.ne.s32.totalorder %s92, %s94
      %p101 = scmp.eq.s32.totalorder %s21, 1
      %p102 = por %p100, %p101
      %p103 = scmp.ne.s32.totalorder %s94, %s95
      %p104 = scmp.eq.s32.totalorder %s21, 0
      %p105 = por %p103, %p104
      %p106 = scmp.ne.s32.totalorder %s94, %s95
      %p107 = scmp.eq.s32.totalorder %s22, 1
      %p108 = por %p106, %p107
      %p110 = scmp.ne.s32.totalorder %s95, %s109
      %p111 = scmp.eq.s32.totalorder %s22, 0
      %p112 = por %p110, %p111
      %s114 = sadd.s32 %s113, 1
      %p117 = scmp.eq.s32.totalorder %s16, 1
      %p118 = scmp.ne.s32.totalorder %s113, %s115
      %p119 = scmp.eq.s32.totalorder %s16, 0
      %p120 = por %p118, %p119
      %p121 = scmp.ne.s32.totalorder %s113, %s115
      %p122 = scmp.eq.s32.totalorder %s21, 1
      %p123 = por %p121, %p122
      %p124 = scmp.ne.s32.totalorder %s115, %s116
      %p125 = scmp.eq.s32.totalorder %s21, 0
      %p126 = por %p124, %p125
      %p127 = scmp.ne.s32.totalorder %s115, %s116
      %p128 = scmp.eq.s32.totalorder %s22, 1
      %p129 = por %p127, %p128
      %p131 = scmp.ne.s32.totalorder %s116, %s130
      %p132 = scmp.eq.s32.totalorder %s22, 0
      %p133 = por %p131, %p132
      %s135 = sadd.s32 %s134, 1
      %p138 = scmp.eq.s32.totalorder %s16, 1
      %p139 = scmp.ne.s32.totalorder %s134, %s136
      %p140 = scmp.eq.s32.totalorder %s16, 0
      %p141 = por %p139, %p140
      %p142 = scmp.ne.s32.totalorder %s134, %s136
      %p143 = scmp.eq.s32.totalorder %s21, 1
      %p144 = por %p142, %p143
      %p145 = scmp.ne.s32.totalorder %s136, %s137
      %p146 = scmp.eq.s32.totalorder %s21, 0
      %p147 = por %p145, %p146
      %p148 = scmp.ne.s32.totalorder %s136, %s137
      %p149 = scmp.eq.s32.totalorder %s22, 1
      %p150 = por %p148, %p149
      %p152 = scmp.ne.s32.totalorder %s137, %s151
      %p153 = scmp.eq.s32.totalorder %s22, 0
      %p154 = por %p152, %p153
      %s156 = sadd.s32 %s155, 1
      %p159 = scmp.eq.s32.totalorder %s16, 1
      %p160 = scmp.ne.s32.totalorder %s155, %s157
      %p161 = scmp.eq.s32.totalorder %s16, 0
      %p162 = por %p160, %p161
      %p163 = scmp.ne.s32.totalorder %s155, %s157
      %p164 = scmp.eq.s32.totalorder %s21, 1
      %p165 = por %p163, %p164
      %p166 = scmp.ne.s32.totalorder %s157, %s158
      %p167 = scmp.eq.s32.totalorder %s21, 0
      %p168 = por %p166, %p167
      %p169 = scmp.ne.s32.totalorder %s157, %s158
      %p170 = scmp.eq.s32.totalorder %s22, 1
      %p171 = por %p169, %p170
      %p173 = scmp.ne.s32.totalorder %s158, %s172
      %p174 = scmp.eq.s32.totalorder %s22, 0
      %p175 = por %p173, %p174
      %s176 = ssub.s32 %s16, %s23
      %p177 = scmp.eq.s32.totalorder %s176, 0
      %s179 = sadd.s32 %s178, 1
      %s180 = scalar_select %p177, %s178, %s179
      %p183 = pneg %p177
      %p184 = scmp.eq.s32.totalorder %s16, 1
      %p185 = por %p183, %p184
      %p186 = scmp.ne.s32.totalorder %s178, %s181
      %p187 = scmp.eq.s32.totalorder %s16, 0
      %p188 = por %p186, %p187
      %p189 = scmp.ne.s32.totalorder %s178, %s181
      %p190 = scmp.eq.s32.totalorder %s21, 1
      %p191 = por %p189, %p190
      %p192 = scmp.ne.s32.totalorder %s181, %s182
      %p193 = scmp.eq.s32.totalorder %s21, 0
      %p194 = por %p192, %p193
      %p195 = scmp.ne.s32.totalorder %s181, %s182
      %p196 = scmp.eq.s32.totalorder %s22, 1
      %p197 = por %p195, %p196
      %p199 = scmp.ne.s32.totalorder %s182, %s198
      %p200 = scmp.eq.s32.totalorder %s22, 0
      %p201 = por %p199, %p200
      %p202 = scmp.le.s32.totalorder 1, %s16
      %p203 = scmp.lt.s32.totalorder %s16, 3
      %p204 = pnand %p202, %p203
      %p205 = pneg %p204
      // Predicated region
      $region9: #{tpu_custom_call.1} parent=5 // pred_check
        _
      $region10: #{tpu_custom_call.1} parent=5 // pred_check_branch
        %207 = sbr.rel (%p204) target = $region12
      $region11: #{tpu_custom_call.1} parent=5 // pred_region
        %s208 = ssub.s32 %s16, 1
        // Predicated region
        $region13: #{tpu_custom_call.1} parent=11 // pred_check
          %p209 = pneg %p63
        $region14: #{tpu_custom_call.1} parent=11 // pred_check_branch
          %211 = sbr.rel (%p209) target = $region16
        $region15: #{tpu_custom_call.1} parent=11 // pred_region
          _
        $region16: #{tpu_custom_call.1} parent=11 // pred_fallthru
          _
        // Predicated region
        $region17: #{tpu_custom_call.1} parent=11 // pred_check
          %p212 = pneg %p84
        $region18: #{tpu_custom_call.1} parent=11 // pred_check_branch
          %214 = sbr.rel (%p212) target = $region20
        $region19: #{tpu_custom_call.1} parent=11 // pred_region
          _
        $region20: #{tpu_custom_call.1} parent=11 // pred_fallthru
          _
        // Predicated region
        $region21: #{tpu_custom_call.1} parent=11 // pred_check
          %p215 = pneg %p105
        $region22: #{tpu_custom_call.1} parent=11 // pred_check_branch
          %217 = sbr.rel (%p215) target = $region24
        $region23: #{tpu_custom_call.1} parent=11 // pred_region
          _
        $region24: #{tpu_custom_call.1} parent=11 // pred_fallthru
          _
        // Predicated region
        $region25: #{tpu_custom_call.1} parent=11 // pred_check
          %p218 = pneg %p126
        $region26: #{tpu_custom_call.1} parent=11 // pred_check_branch
          %220 = sbr.rel (%p218) target = $region28
        $region27: #{tpu_custom_call.1} parent=11 // pred_region
          _
        $region28: #{tpu_custom_call.1} parent=11 // pred_fallthru
          _
        // Predicated region
        $region29: #{tpu_custom_call.1} parent=11 // pred_check
          %p221 = pneg %p147
        $region30: #{tpu_custom_call.1} parent=11 // pred_check_branch
          %223 = sbr.rel (%p221) target = $region32
        $region31: #{tpu_custom_call.1} parent=11 // pred_region
          _
        $region32: #{tpu_custom_call.1} parent=11 // pred_fallthru
          _
        // Predicated region
        $region33: #{tpu_custom_call.1} parent=11 // pred_check
          %p224 = pneg %p168
        $region34: #{tpu_custom_call.1} parent=11 // pred_check_branch
          %226 = sbr.rel (%p224) target = $region36
        $region35: #{tpu_custom_call.1} parent=11 // pred_region
          _
        $region36: #{tpu_custom_call.1} parent=11 // pred_fallthru
          _
      $region12: #{tpu_custom_call.1} parent=5 // pred_fallthru
        _
      %p227 = scmp.lt.s32.totalorder %s16, 2
      // Predicated region
      $region37: #{tpu_custom_call.1} parent=5 // pred_check
        %p228 = pneg %p227
      $region38: #{tpu_custom_call.1} parent=5 // pred_check_branch
        %230 = sbr.rel (%p228) target = $region40
      $region39: #{tpu_custom_call.1} parent=5 // pred_region
        // Predicated region
        $region41: #{tpu_custom_call.1} parent=39 // pred_check
          %p231 = pneg %p36
        $region42: #{tpu_custom_call.1} parent=39 // pred_check_branch
          %233 = sbr.rel (%p231) target = $region44
        $region43: #{tpu_custom_call.1} parent=39 // pred_region
          %p234 = scmp.lt.s32.totalorder %s16, 1
          %s235 = scalar_select %p234, %s16, 1
          %s236 = smul.addr %s235, 8
          %s237 = scalar_lea.vmem %s0, %s236
        $region44: #{tpu_custom_call.1} parent=39 // pred_fallthru
          _
      $region40: #{tpu_custom_call.1} parent=5 // pred_fallthru
        _
      %p238 = scmp.le.s32.totalorder 1, %s16
      %p239 = scmp.lt.s32.totalorder %s16, 3
      %p240 = pnand %p238, %p239
      %p241 = pneg %p240
      // Predicated region
      $region45: #{tpu_custom_call.1} parent=5 // pred_check
        _
      $region46: #{tpu_custom_call.1} parent=5 // pred_check_branch
        %243 = sbr.rel (%p240) target = $region48
      $region47: #{tpu_custom_call.1} parent=5 // pred_region
        %s244 = ssub.s32 %s16, 1
        %p245 = scmp.lt.s32.totalorder %s21, 1
        %s246 = scalar_select %p245, %s21, 1
        %s247 = smul.addr %s246, 8
        %s248 = scalar_lea.vmem %s0, %s247
        %p249 = pneg %p42
        %p250 = pneg %p39
        %p251 = pneg %p63
        %p252 = pneg %p60
        %p253 = pneg %p84
        %p254 = pneg %p81
        %p255 = pneg %p105
        %p256 = pneg %p102
        %p257 = pneg %p126
        %p258 = pneg %p123
        %p259 = pneg %p147
        %p260 = pneg %p144
        %p261 = pneg %p168
        %p262 = pneg %p165
        %p263 = pneg %p194
        %p264 = pneg %p191
        %s265 = sand.u32 %s181, 1
        %s266 = scalar_lea.sflag [#allocation7], %s265
        %s267 = sand.u32 %s181, 1
        %s268 = smul.addr %s267, 8
        %s269 = scalar_lea.vmem [#allocation6], %s268
        %p270 = scmp.lt.s32.totalorder %s21, 1
        %s271 = scalar_select %p270, %s21, 1
        %s272 = smul.addr %s271, 8
        %s273 = scalar_lea.vmem %s0, %s272
        %v274 = vld [vmem:[%s273] sm:$0xff]
        %vm275 = vcmask 261120
        %v276 = vsel %vm275, %v274, 0.0
        %277 = vadd.xlane.f32.xlu0 %v276
        %v278 = vpop.xlane.xlu0 %277
        %v279 = vrcp.pop 32.0
        %v280 = vmul.f32 %v278, %v279
        %v281 = vsub.f32 %v274, %v280
        %v282 = vmul.f32 %v281, %v281
        %v283 = vsel %vm275, %v282, 0.0
        %284 = vadd.xlane.f32.xlu0 %v283
        %v285 = vpop.xlane.xlu0 %284
        %v286 = vmul.f32 %v285, %v279
        %v287 = vadd.f32 %v286, 1e-05
        %v288 = vrsqrt.pop %v287
        %v289 = vmul.f32 %v281, %v288
        %v290 = vld [vmem:[%s1] sm:$0x1]
        %v292 = vlaneseq
        %v293 = vshrl.u32 %v292, 7
        %v294 = vsub.s32 0, %v293
        %v295 = vrot.slane %v290, %v294
        %v297 = vmul.f32 %v289, %v295
        %v298 = vld [vmem:[%s2] sm:$0xff]
        %v299 = vld [vmem:[%s2 + $0x8] sm:$0xff]
        %v300 = vld [vmem:[%s2 + $0x10] sm:$0xff]
        %v301 = vld [vmem:[%s2 + $0x18] sm:$0xff]
        %v303 = vsel %vm275, %v297, 0
        %305 = vmatprep.subr.mxu0 0.0
        %306 = vmatpush1.msra.mxu0 0.0
        %307 = vmatprep.subr.mxu0 0.0
        %308 = vmatpush1.msra.mxu0 0.0
        %309 = vmatprep.subr.mxu0 0.0
        %310 = vmatpush1.msra.mxu0 0.0
        %311 = vmatprep.subr.mxu0 0.0
        %312 = vmatpush1.msra.mxu0 0.0
        %313 = vmatprep.subr.mxu0 0.0
        %314 = vmatpush1.msra.mxu0 0.0
        %315 = vmatprep.subr.mxu0 0.0
        %316 = vmatpush1.msra.mxu0 0.0
        %317 = vmatprep.subr.mxu0 0.0
        %318 = vmatpush1.msra.mxu0 0.0
        %319 = vmatprep.subr.mxu0 0.0
        %320 = vmatpush1.msra.mxu0 0.0
        %321 = vmatprep.subr.mxu0 0.0
        %322 = vmatpush1.msra.mxu0 0.0
        %323 = vmatprep.subr.mxu0 0.0
        %324 = vmatpush1.msra.mxu0 0.0
        %325 = vmatprep.subr.mxu0 0.0
        %326 = vmatpush1.msra.mxu0 0.0
        %327 = vmatprep.subr.mxu0 0.0
        %328 = vmatpush1.msra.mxu0 0.0
        %329 = vmatprep.subr.mxu0 0.0
        %330 = vmatpush1.msra.mxu0 %v301
        %331 = vmatprep.subr.mxu0 0.0
        %332 = vmatpush1.msra.mxu0 %v300
        %333 = vmatprep.subr.mxu0 0.0
        %334 = vmatpush1.msra.mxu0 %v299
        %335 = vmatprep.subr.mxu0 0.0
        %336 = vmatpush1.msra.mxu0 %v298
        %337 = vmatprep.subr.mxu0 0.0
        %338 = vmatpush2.msra.mxu0 0.0
        %339 = vmatprep.subr.mxu0 0.0
        %340 = vmatpush2.msra.mxu0 0.0
        %341 = vmatprep.subr.mxu0 0.0
        %342 = vmatpush2.msra.mxu0 0.0
        %343 = vmatprep.subr.mxu0 0.0
        %344 = vmatpush2.msra.mxu0 0.0
        %345 = vmatprep.subr.mxu0 0.0
        %346 = vmatpush2.msra.mxu0 0.0
        %347 = vmatprep.subr.mxu0 0.0
        %348 = vmatpush2.msra.mxu0 0.0
        %349 = vmatprep.subr.mxu0 0.0
        %350 = vmatpush2.msra.mxu0 0.0
        %351 = vmatprep.subr.mxu0 0.0
        %352 = vmatpush2.msra.mxu0 0.0
        %353 = vmatprep.subr.mxu0 0.0
        %354 = vmatpush2.msra.mxu0 0.0
        %355 = vmatprep.subr.mxu0 0.0
        %356 = vmatpush2.msra.mxu0 0.0
        %357 = vmatprep.subr.mxu0 0.0
        %358 = vmatpush2.msra.mxu0 0.0
        %359 = vmatprep.subr.mxu0 0.0
        %360 = vmatpush2.msra.mxu0 0.0
        %361 = vmatprep.subr.mxu0 0.0
        %362 = vmatpush2.msra.mxu0 0.0
        %363 = vmatprep.subr.mxu0 0.0
        %364 = vmatpush2.msra.mxu0 0.0
        %365 = vmatprep.subr.mxu0 0.0
        %366 = vmatpush2.msra.mxu0 0.0
        %367 = vmatprep.subr.mxu0 0.0
        %368 = vmatpush2.msra.mxu0 0.0
        %369 = vmatprep.mubr.f32.mxu0 0.0
        %370 = vmatmul.mubr.f32.gmra.mxu0 %v303
        %v371 = vpop.f32.mrf.mxu0
        %v372 = vadd.f32 0.0, %v371
        %v373 = vpop.f32.mrf.mxu0
        %374 = vdwg.mxu0
        %v375 = vld [vmem:[%s3] sm:$0xff]
        %v376 = vld [vmem:[%s3 + $0x8] sm:$0xff]
        %v377 = vld [vmem:[%s3 + $0x10] sm:$0xff]
        %v378 = vld [vmem:[%s3 + $0x18] sm:$0xff]
        %379 = vmatprep.subr.mxu0 0.0
        %380 = vmatpush1.msra.mxu0 0.0
        %381 = vmatprep.subr.mxu0 0.0
        %382 = vmatpush1.msra.mxu0 0.0
        %383 = vmatprep.subr.mxu0 0.0
        %384 = vmatpush1.msra.mxu0 0.0
        %385 = vmatprep.subr.mxu0 0.0
        %386 = vmatpush1.msra.mxu0 0.0
        %387 = vmatprep.subr.mxu0 0.0
        %388 = vmatpush1.msra.mxu0 0.0
        %389 = vmatprep.subr.mxu0 0.0
        %390 = vmatpush1.msra.mxu0 0.0
        %391 = vmatprep.subr.mxu0 0.0
        %392 = vmatpush1.msra.mxu0 0.0
        %393 = vmatprep.subr.mxu0 0.0
        %394 = vmatpush1.msra.mxu0 0.0
        %395 = vmatprep.subr.mxu0 0.0
        %396 = vmatpush1.msra.mxu0 0.0
        %397 = vmatprep.subr.mxu0 0.0
        %398 = vmatpush1.msra.mxu0 0.0
        %399 = vmatprep.subr.mxu0 0.0
        %400 = vmatpush1.msra.mxu0 0.0
        %401 = vmatprep.subr.mxu0 0.0
        %402 = vmatpush1.msra.mxu0 0.0
        %403 = vmatprep.subr.mxu0 0.0
        %404 = vmatpush1.msra.mxu0 %v378
        %405 = vmatprep.subr.mxu0 0.0
        %406 = vmatpush1.msra.mxu0 %v377
        %407 = vmatprep.subr.mxu0 0.0
        %408 = vmatpush1.msra.mxu0 %v376
        %409 = vmatprep.subr.mxu0 0.0
        %410 = vmatpush1.msra.mxu0 %v375
        %411 = vmatprep.subr.mxu0 0.0
        %412 = vmatpush2.msra.mxu0 0.0
        %413 = vmatprep.subr.mxu0 0.0
        %414 = vmatpush2.msra.mxu0 0.0
        %415 = vmatprep.subr.mxu0 0.0
        %416 = vmatpush2.msra.mxu0 0.0
        %417 = vmatprep.subr.mxu0 0.0
        %418 = vmatpush2.msra.mxu0 0.0
        %419 = vmatprep.subr.mxu0 0.0
        %420 = vmatpush2.msra.mxu0 0.0
        %421 = vmatprep.subr.mxu0 0.0
        %422 = vmatpush2.msra.mxu0 0.0
        %423 = vmatprep.subr.mxu0 0.0
        %424 = vmatpush2.msra.mxu0 0.0
        %425 = vmatprep.subr.mxu0 0.0
        %426 = vmatpush2.msra.mxu0 0.0
        %427 = vmatprep.subr.mxu0 0.0
        %428 = vmatpush2.msra.mxu0 0.0
        %429 = vmatprep.subr.mxu0 0.0
        %430 = vmatpush2.msra.mxu0 0.0
        %431 = vmatprep.subr.mxu0 0.0
        %432 = vmatpush2.msra.mxu0 0.0
        %433 = vmatprep.subr.mxu0 0.0
        %434 = vmatpush2.msra.mxu0 0.0
        %435 = vmatprep.subr.mxu0 0.0
        %436 = vmatpush2.msra.mxu0 0.0
        %437 = vmatprep.subr.mxu0 0.0
        %438 = vmatpush2.msra.mxu0 0.0
        %439 = vmatprep.subr.mxu0 0.0
        %440 = vmatpush2.msra.mxu0 0.0
        %441 = vmatprep.subr.mxu0 0.0
        %442 = vmatpush2.msra.mxu0 0.0
        %443 = vmatprep.mubr.f32.mxu0 0.0
        %444 = vmatmul.mubr.f32.gmra.mxu0 %v303
        %v445 = vpop.f32.mrf.mxu0
        %v446 = vadd.f32 0.0, %v445
        %v447 = vpop.f32.mrf.mxu0
        %448 = vdwg.mxu0
        %vm449 = vcmask 523264
        %450 = vst.msk [vmem:[#allocation2] sm:$0xff] %vm449, %v372
        %451 = vst.msk [vmem:[#allocation3] sm:$0xff] %vm449, %v446
        %453 = vrot.lane.b32.xlu0 %v446, 64
        %v454 = vpop.permute.xlu0 %453
        %456 = vst.msk [vmem:[#allocation4] sm:$0xff] %vm449, %v454
        %v457 = vld [vmem:[%s4] sm:$0x1]
        %v458 = vld [vmem:[%s5] sm:$0x1]
        %v459 = vld [vmem:[#allocation2] sm:$0xff]
        %v460 = vld [vmem:[#allocation3] sm:$0xff]
        %v461 = vld [vmem:[#allocation4] sm:$0xff]
        %v462 = vmul.f32 %v459, %v459
        %vm463 = vcmask 130048
        %v464 = vsel %vm463, %v462, 0.0
        %465 = vadd.xlane.f32.xlu0 %v464
        %v466 = vpop.xlane.xlu0 %465
        %v467 = vmax.f32 %v466, 1e-24
        %v468 = vrsqrt.pop %v467
        %v469 = vmul.f32 %v460, %v460
        %v470 = vsel %vm463, %v469, 0.0
        %471 = vadd.xlane.f32.xlu0 %v470
        %v472 = vpop.xlane.xlu0 %471
        %v473 = vmax.f32 %v472, 1e-24
        %v474 = vrsqrt.pop %v473
        %v475 = vmul.f32 %v459, %v468
        %v477 = vlaneseq
        %v478 = vshrl.u32 %v477, 7
        %v479 = vsub.s32 0, %v478
        %v480 = vrot.slane %v457, %v479
        %v482 = vmul.f32 %v475, %v480
        %v483 = vmul.f32 %v460, %v474
        %v485 = vlaneseq
        %v486 = vshrl.u32 %v485, 7
        %v487 = vsub.s32 0, %v486
        %v488 = vrot.slane %v458, %v487
        %v490 = vmul.f32 %v483, %v488
        %v492 = vsel %vm463, %v482, 0
        %v495 = vsel %vm463, %v490, 0
        %497 = vmatprep.subr.mxu0 0.0
        %498 = vmatpush1.xpose.msra.mxu0 0.0
        %499 = vmatprep.subr.mxu0 0.0
        %500 = vmatpush1.xpose.msra.mxu0 0.0
        %501 = vmatprep.subr.mxu0 0.0
        %502 = vmatpush1.xpose.msra.mxu0 0.0
        %503 = vmatprep.subr.mxu0 0.0
        %504 = vmatpush1.xpose.msra.mxu0 0.0
        %505 = vmatprep.subr.mxu0 0.0
        %506 = vmatpush1.xpose.msra.mxu0 0.0
        %507 = vmatprep.subr.mxu0 0.0
        %508 = vmatpush1.xpose.msra.mxu0 0.0
        %509 = vmatprep.subr.mxu0 0.0
        %510 = vmatpush1.xpose.msra.mxu0 0.0
        %511 = vmatprep.subr.mxu0 0.0
        %512 = vmatpush1.xpose.msra.mxu0 0.0
        %513 = vmatprep.subr.mxu0 0.0
        %514 = vmatpush1.xpose.msra.mxu0 0.0
        %515 = vmatprep.subr.mxu0 0.0
        %516 = vmatpush1.xpose.msra.mxu0 0.0
        %517 = vmatprep.subr.mxu0 0.0
        %518 = vmatpush1.xpose.msra.mxu0 0.0
        %519 = vmatprep.subr.mxu0 0.0
        %520 = vmatpush1.xpose.msra.mxu0 0.0
        %521 = vmatprep.subr.mxu0 0.0
        %522 = vmatpush1.xpose.msra.mxu0 0.0
        %523 = vmatprep.subr.mxu0 0.0
        %524 = vmatpush1.xpose.msra.mxu0 0.0
        %525 = vmatprep.subr.mxu0 0.0
        %526 = vmatpush1.xpose.msra.mxu0 0.0
        %527 = vmatprep.subr.mxu0 0.0
        %528 = vmatpush1.xpose.msra.mxu0 %v495
        %529 = vmatprep.subr.mxu0 0.0
        %530 = vmatpush2.xpose.msra.mxu0 0.0
        %531 = vmatprep.subr.mxu0 0.0
        %532 = vmatpush2.xpose.msra.mxu0 0.0
        %533 = vmatprep.subr.mxu0 0.0
        %534 = vmatpush2.xpose.msra.mxu0 0.0
        %535 = vmatprep.subr.mxu0 0.0
        %536 = vmatpush2.xpose.msra.mxu0 0.0
        %537 = vmatprep.subr.mxu0 0.0
        %538 = vmatpush2.xpose.msra.mxu0 0.0
        %539 = vmatprep.subr.mxu0 0.0
        %540 = vmatpush2.xpose.msra.mxu0 0.0
        %541 = vmatprep.subr.mxu0 0.0
        %542 = vmatpush2.xpose.msra.mxu0 0.0
        %543 = vmatprep.subr.mxu0 0.0
        %544 = vmatpush2.xpose.msra.mxu0 0.0
        %545 = vmatprep.subr.mxu0 0.0
        %546 = vmatpush2.xpose.msra.mxu0 0.0
        %547 = vmatprep.subr.mxu0 0.0
        %548 = vmatpush2.xpose.msra.mxu0 0.0
        %549 = vmatprep.subr.mxu0 0.0
        %550 = vmatpush2.xpose.msra.mxu0 0.0
        %551 = vmatprep.subr.mxu0 0.0
        %552 = vmatpush2.xpose.msra.mxu0 0.0
        %553 = vmatprep.subr.mxu0 0.0
        %554 = vmatpush2.xpose.msra.mxu0 0.0
        %555 = vmatprep.subr.mxu0 0.0
        %556 = vmatpush2.xpose.msra.mxu0 0.0
        %557 = vmatprep.subr.mxu0 0.0
        %558 = vmatpush2.xpose.msra.mxu0 0.0
        %559 = vmatprep.subr.mxu0 0.0
        %560 = vmatpush2.xpose.msra.mxu0 0.0
        %561 = vmatprep.mubr.f32.mxu0 0.0
        %562 = vmatmul.mubr.f32.gmra.mxu0 %v492
        %v563 = vpop.f32.mrf.mxu0
        %v564 = vadd.f32 0.0, %v563
        %v565 = vpop.f32.mrf.mxu0
        %566 = vdwg.mxu0
        %vm567 = vcmask 64512
        %v568 = vsel %vm567, %v564, -inf
        %569 = vmax.xlane.f32.xlu0 %v568
        %v570 = vpop.xlane.xlu0 %569
        %v571 = vsub.f32 %v564, %v570
        %v572 = vmul.f32 %v571, 1.442695
        %v573 = vpow.pop %v572
        %v574 = vsel %vm567, %v573, 0.0
        %575 = vadd.xlane.f32.xlu0 %v574
        %v576 = vpop.xlane.xlu0 %575
        %v578 = vsel %vm567, %v573, 0
        %580 = vmatprep.subr.mxu0 0.0
        %581 = vmatpush1.msra.mxu0 0.0
        %582 = vmatprep.subr.mxu0 0.0
        %583 = vmatpush1.msra.mxu0 0.0
        %584 = vmatprep.subr.mxu0 0.0
        %585 = vmatpush1.msra.mxu0 0.0
        %586 = vmatprep.subr.mxu0 0.0
        %587 = vmatpush1.msra.mxu0 0.0
        %588 = vmatprep.subr.mxu0 0.0
        %589 = vmatpush1.msra.mxu0 0.0
        %590 = vmatprep.subr.mxu0 0.0
        %591 = vmatpush1.msra.mxu0 0.0
        %592 = vmatprep.subr.mxu0 0.0
        %593 = vmatpush1.msra.mxu0 0.0
        %594 = vmatprep.subr.mxu0 0.0
        %595 = vmatpush1.msra.mxu0 0.0
        %596 = vmatprep.subr.mxu0 0.0
        %597 = vmatpush1.msra.mxu0 0.0
        %598 = vmatprep.subr.mxu0 0.0
        %599 = vmatpush1.msra.mxu0 0.0
        %600 = vmatprep.subr.mxu0 0.0
        %601 = vmatpush1.msra.mxu0 0.0
        %602 = vmatprep.subr.mxu0 0.0
        %603 = vmatpush1.msra.mxu0 0.0
        %604 = vmatprep.subr.mxu0 0.0
        %605 = vmatpush1.msra.mxu0 0.0
        %606 = vmatprep.subr.mxu0 0.0
        %607 = vmatpush1.msra.mxu0 0.0
        %608 = vmatprep.subr.mxu0 0.0
        %609 = vmatpush1.msra.mxu0 0.0
        %610 = vmatprep.subr.mxu0 0.0
        %611 = vmatpush1.msra.mxu0 %v461
        %612 = vmatprep.subr.mxu0 0.0
        %613 = vmatpush2.msra.mxu0 0.0
        %614 = vmatprep.subr.mxu0 0.0
        %615 = vmatpush2.msra.mxu0 0.0
        %616 = vmatprep.subr.mxu0 0.0
        %617 = vmatpush2.msra.mxu0 0.0
        %618 = vmatprep.subr.mxu0 0.0
        %619 = vmatpush2.msra.mxu0 0.0
        %620 = vmatprep.subr.mxu0 0.0
        %621 = vmatpush2.msra.mxu0 0.0
        %622 = vmatprep.subr.mxu0 0.0
        %623 = vmatpush2.msra.mxu0 0.0
        %624 = vmatprep.subr.mxu0 0.0
        %625 = vmatpush2.msra.mxu0 0.0
        %626 = vmatprep.subr.mxu0 0.0
        %627 = vmatpush2.msra.mxu0 0.0
        %628 = vmatprep.subr.mxu0 0.0
        %629 = vmatpush2.msra.mxu0 0.0
        %630 = vmatprep.subr.mxu0 0.0
        %631 = vmatpush2.msra.mxu0 0.0
        %632 = vmatprep.subr.mxu0 0.0
        %633 = vmatpush2.msra.mxu0 0.0
        %634 = vmatprep.subr.mxu0 0.0
        %635 = vmatpush2.msra.mxu0 0.0
        %636 = vmatprep.subr.mxu0 0.0
        %637 = vmatpush2.msra.mxu0 0.0
        %638 = vmatprep.subr.mxu0 0.0
        %639 = vmatpush2.msra.mxu0 0.0
        %640 = vmatprep.subr.mxu0 0.0
        %641 = vmatpush2.msra.mxu0 0.0
        %642 = vmatprep.subr.mxu0 0.0
        %643 = vmatpush2.msra.mxu0 0.0
        %644 = vmatprep.mubr.f32.mxu0 0.0
        %645 = vmatmul.mubr.f32.gmra.mxu0 %v578
        %v646 = vpop.f32.mrf.mxu0
        %v647 = vadd.f32 0.0, %v646
        %v648 = vpop.f32.mrf.mxu0
        %649 = vdwg.mxu0
        %v650 = vrcp.pop %v576
        %v651 = vmul.f32 %v647, %v650
        %652 = vst.msk [vmem:[#allocation5] sm:$0xff] %vm463, %v651
        %v653 = vld [vmem:[#allocation2] sm:$0xff]
        %v654 = vld [vmem:[#allocation3] sm:$0xff]
        %v655 = vld [vmem:[#allocation4] sm:$0xff]
        %v656 = vmul.f32 %v653, %v653
        %658 = vrot.lane.b32.xlu0 %v656, 112
        %v659 = vpop.permute.xlu0 %658
        %v661 = vsel %vm463, %v659, 0.0
        %662 = vadd.xlane.f32.xlu0 %v661
        %v663 = vpop.xlane.xlu0 %662
        %v664 = vmax.f32 %v663, 1e-24
        %v665 = vrsqrt.pop %v664
        %v666 = vmul.f32 %v654, %v654
        %668 = vrot.lane.b32.xlu0 %v666, 112
        %v669 = vpop.permute.xlu0 %668
        %v671 = vsel %vm463, %v669, 0.0
        %672 = vadd.xlane.f32.xlu0 %v671
        %v673 = vpop.xlane.xlu0 %672
        %v674 = vmax.f32 %v673, 1e-24
        %v675 = vrsqrt.pop %v674
        %v676 = vmul.f32 %v653, %v665
        %677 = vrot.lane.b32.xlu0 %v480, 16
        %v678 = vpop.permute.xlu0 %677
        %v680 = vmul.f32 %v676, %v678
        %v681 = vmul.f32 %v654, %v675
        %682 = vrot.lane.b32.xlu0 %v488, 16
        %v683 = vpop.permute.xlu0 %682
        %v685 = vmul.f32 %v681, %v683
        %687 = vrot.lane.b32.xlu0 %v680, 112
        %v688 = vpop.permute.xlu0 %687
        %690 = vrot.lane.b32.xlu0 %v685, 112
        %v691 = vpop.permute.xlu0 %690
        %v692 = vsel %vm463, %v688, 0
        %v694 = vsel %vm463, %v691, 0
        %696 = vmatprep.subr.mxu0 0.0
        %697 = vmatpush1.xpose.msra.mxu0 0.0
        %698 = vmatprep.subr.mxu0 0.0
        %699 = vmatpush1.xpose.msra.mxu0 0.0
        %700 = vmatprep.subr.mxu0 0.0
        %701 = vmatpush1.xpose.msra.mxu0 0.0
        %702 = vmatprep.subr.mxu0 0.0
        %703 = vmatpush1.xpose.msra.mxu0 0.0
        %704 = vmatprep.subr.mxu0 0.0
        %705 = vmatpush1.xpose.msra.mxu0 0.0
        %706 = vmatprep.subr.mxu0 0.0
        %707 = vmatpush1.xpose.msra.mxu0 0.0
        %708 = vmatprep.subr.mxu0 0.0
        %709 = vmatpush1.xpose.msra.mxu0 0.0
        %710 = vmatprep.subr.mxu0 0.0
        %711 = vmatpush1.xpose.msra.mxu0 0.0
        %712 = vmatprep.subr.mxu0 0.0
        %713 = vmatpush1.xpose.msra.mxu0 0.0
        %714 = vmatprep.subr.mxu0 0.0
        %715 = vmatpush1.xpose.msra.mxu0 0.0
        %716 = vmatprep.subr.mxu0 0.0
        %717 = vmatpush1.xpose.msra.mxu0 0.0
        %718 = vmatprep.subr.mxu0 0.0
        %719 = vmatpush1.xpose.msra.mxu0 0.0
        %720 = vmatprep.subr.mxu0 0.0
        %721 = vmatpush1.xpose.msra.mxu0 0.0
        %722 = vmatprep.subr.mxu0 0.0
        %723 = vmatpush1.xpose.msra.mxu0 0.0
        %724 = vmatprep.subr.mxu0 0.0
        %725 = vmatpush1.xpose.msra.mxu0 0.0
        %726 = vmatprep.subr.mxu0 0.0
        %727 = vmatpush1.xpose.msra.mxu0 %v694
        %728 = vmatprep.subr.mxu0 0.0
        %729 = vmatpush2.xpose.msra.mxu0 0.0
        %730 = vmatprep.subr.mxu0 0.0
        %731 = vmatpush2.xpose.msra.mxu0 0.0
        %732 = vmatprep.subr.mxu0 0.0
        %733 = vmatpush2.xpose.msra.mxu0 0.0
        %734 = vmatprep.subr.mxu0 0.0
        %735 = vmatpush2.xpose.msra.mxu0 0.0
        %736 = vmatprep.subr.mxu0 0.0
        %737 = vmatpush2.xpose.msra.mxu0 0.0
        %738 = vmatprep.subr.mxu0 0.0
        %739 = vmatpush2.xpose.msra.mxu0 0.0
        %740 = vmatprep.subr.mxu0 0.0
        %741 = vmatpush2.xpose.msra.mxu0 0.0
        %742 = vmatprep.subr.mxu0 0.0
        %743 = vmatpush2.xpose.msra.mxu0 0.0
        %744 = vmatprep.subr.mxu0 0.0
        %745 = vmatpush2.xpose.msra.mxu0 0.0
        %746 = vmatprep.subr.mxu0 0.0
        %747 = vmatpush2.xpose.msra.mxu0 0.0
        %748 = vmatprep.subr.mxu0 0.0
        %749 = vmatpush2.xpose.msra.mxu0 0.0
        %750 = vmatprep.subr.mxu0 0.0
        %751 = vmatpush2.xpose.msra.mxu0 0.0
        %752 = vmatprep.subr.mxu0 0.0
        %753 = vmatpush2.xpose.msra.mxu0 0.0
        %754 = vmatprep.subr.mxu0 0.0
        %755 = vmatpush2.xpose.msra.mxu0 0.0
        %756 = vmatprep.subr.mxu0 0.0
        %757 = vmatpush2.xpose.msra.mxu0 0.0
        %758 = vmatprep.subr.mxu0 0.0
        %759 = vmatpush2.xpose.msra.mxu0 0.0
        %760 = vmatprep.mubr.f32.mxu0 0.0
        %761 = vmatmul.mubr.f32.gmra.mxu0 %v692
        %v762 = vpop.f32.mrf.mxu0
        %v763 = vadd.f32 0.0, %v762
        %v764 = vpop.f32.mrf.mxu0
        %765 = vdwg.mxu0
        %v766 = vsel %vm567, %v763, -inf
        %767 = vmax.xlane.f32.xlu0 %v766
        %v768 = vpop.xlane.xlu0 %767
        %v769 = vsub.f32 %v763, %v768
        %v770 = vmul.f32 %v769, 1.442695
        %v771 = vpow.pop %v770
        %v772 = vsel %vm567, %v771, 0.0
        %773 = vadd.xlane.f32.xlu0 %v772
        %v774 = vpop.xlane.xlu0 %773
        %776 = vrot.lane.b32.xlu0 %v655, 112
        %v777 = vpop.permute.xlu0 %776
        %v780 = vsel %vm567, %v771, 0
        %782 = vmatprep.subr.mxu0 0.0
        %783 = vmatpush1.msra.mxu0 0.0
        %784 = vmatprep.subr.mxu0 0.0
        %785 = vmatpush1.msra.mxu0 0.0
        %786 = vmatprep.subr.mxu0 0.0
        %787 = vmatpush1.msra.mxu0 0.0
        %788 = vmatprep.subr.mxu0 0.0
        %789 = vmatpush1.msra.mxu0 0.0
        %790 = vmatprep.subr.mxu0 0.0
        %791 = vmatpush1.msra.mxu0 0.0
        %792 = vmatprep.subr.mxu0 0.0
        %793 = vmatpush1.msra.mxu0 0.0
        %794 = vmatprep.subr.mxu0 0.0
        %795 = vmatpush1.msra.mxu0 0.0
        %796 = vmatprep.subr.mxu0 0.0
        %797 = vmatpush1.msra.mxu0 0.0
        %798 = vmatprep.subr.mxu0 0.0
        %799 = vmatpush1.msra.mxu0 0.0
        %800 = vmatprep.subr.mxu0 0.0
        %801 = vmatpush1.msra.mxu0 0.0
        %802 = vmatprep.subr.mxu0 0.0
        %803 = vmatpush1.msra.mxu0 0.0
        %804 = vmatprep.subr.mxu0 0.0
        %805 = vmatpush1.msra.mxu0 0.0
        %806 = vmatprep.subr.mxu0 0.0
        %807 = vmatpush1.msra.mxu0 0.0
        %808 = vmatprep.subr.mxu0 0.0
        %809 = vmatpush1.msra.mxu0 0.0
        %810 = vmatprep.subr.mxu0 0.0
        %811 = vmatpush1.msra.mxu0 0.0
        %812 = vmatprep.subr.mxu0 0.0
        %813 = vmatpush1.msra.mxu0 %v777
        %814 = vmatprep.subr.mxu0 0.0
        %815 = vmatpush2.msra.mxu0 0.0
        %816 = vmatprep.subr.mxu0 0.0
        %817 = vmatpush2.msra.mxu0 0.0
        %818 = vmatprep.subr.mxu0 0.0
        %819 = vmatpush2.msra.mxu0 0.0
        %820 = vmatprep.subr.mxu0 0.0
        %821 = vmatpush2.msra.mxu0 0.0
        %822 = vmatprep.subr.mxu0 0.0
        %823 = vmatpush2.msra.mxu0 0.0
        %824 = vmatprep.subr.mxu0 0.0
        %825 = vmatpush2.msra.mxu0 0.0
        %826 = vmatprep.subr.mxu0 0.0
        %827 = vmatpush2.msra.mxu0 0.0
        %828 = vmatprep.subr.mxu0 0.0
        %829 = vmatpush2.msra.mxu0 0.0
        %830 = vmatprep.subr.mxu0 0.0
        %831 = vmatpush2.msra.mxu0 0.0
        %832 = vmatprep.subr.mxu0 0.0
        %833 = vmatpush2.msra.mxu0 0.0
        %834 = vmatprep.subr.mxu0 0.0
        %835 = vmatpush2.msra.mxu0 0.0
        %836 = vmatprep.subr.mxu0 0.0
        %837 = vmatpush2.msra.mxu0 0.0
        %838 = vmatprep.subr.mxu0 0.0
        %839 = vmatpush2.msra.mxu0 0.0
        %840 = vmatprep.subr.mxu0 0.0
        %841 = vmatpush2.msra.mxu0 0.0
        %842 = vmatprep.subr.mxu0 0.0
        %843 = vmatpush2.msra.mxu0 0.0
        %844 = vmatprep.subr.mxu0 0.0
        %845 = vmatpush2.msra.mxu0 0.0
        %846 = vmatprep.mubr.f32.mxu0 0.0
        %847 = vmatmul.mubr.f32.gmra.mxu0 %v780
        %v848 = vpop.f32.mrf.mxu0
        %v849 = vadd.f32 0.0, %v848
        %v850 = vpop.f32.mrf.mxu0
        %851 = vdwg.mxu0
        %v852 = vrcp.pop %v774
        %v853 = vmul.f32 %v849, %v852
        %855 = vrot.lane.b32.xlu0 %v853, 16
        %v856 = vpop.permute.xlu0 %855
        %vm858 = vcmask 261248
        %859 = vst.msk [vmem:[#allocation5] sm:$0xff] %vm858, %v856
        %v860 = vld [vmem:[#allocation2] sm:$0xff]
        %v861 = vld [vmem:[#allocation3] sm:$0xff]
        %v862 = vld [vmem:[#allocation4] sm:$0xff]
        %v863 = vmul.f32 %v860, %v860
        %865 = vrot.lane.b32.xlu0 %v863, 96
        %v866 = vpop.permute.xlu0 %865
        %v868 = vsel %vm463, %v866, 0.0
        %869 = vadd.xlane.f32.xlu0 %v868
        %v870 = vpop.xlane.xlu0 %869
        %v871 = vmax.f32 %v870, 1e-24
        %v872 = vrsqrt.pop %v871
        %v873 = vmul.f32 %v861, %v861
        %875 = vrot.lane.b32.xlu0 %v873, 96
        %v876 = vpop.permute.xlu0 %875
        %v878 = vsel %vm463, %v876, 0.0
        %879 = vadd.xlane.f32.xlu0 %v878
        %v880 = vpop.xlane.xlu0 %879
        %v881 = vmax.f32 %v880, 1e-24
        %v882 = vrsqrt.pop %v881
        %v883 = vmul.f32 %v860, %v872
        %884 = vrot.lane.b32.xlu0 %v480, 32
        %v885 = vpop.permute.xlu0 %884
        %v887 = vmul.f32 %v883, %v885
        %v888 = vmul.f32 %v861, %v882
        %889 = vrot.lane.b32.xlu0 %v488, 32
        %v890 = vpop.permute.xlu0 %889
        %v892 = vmul.f32 %v888, %v890
        %894 = vrot.lane.b32.xlu0 %v887, 96
        %v895 = vpop.permute.xlu0 %894
        %897 = vrot.lane.b32.xlu0 %v892, 96
        %v898 = vpop.permute.xlu0 %897
        %v899 = vsel %vm463, %v895, 0
        %v901 = vsel %vm463, %v898, 0
        %903 = vmatprep.subr.mxu0 0.0
        %904 = vmatpush1.xpose.msra.mxu0 0.0
        %905 = vmatprep.subr.mxu0 0.0
        %906 = vmatpush1.xpose.msra.mxu0 0.0
        %907 = vmatprep.subr.mxu0 0.0
        %908 = vmatpush1.xpose.msra.mxu0 0.0
        %909 = vmatprep.subr.mxu0 0.0
        %910 = vmatpush1.xpose.msra.mxu0 0.0
        %911 = vmatprep.subr.mxu0 0.0
        %912 = vmatpush1.xpose.msra.mxu0 0.0
        %913 = vmatprep.subr.mxu0 0.0
        %914 = vmatpush1.xpose.msra.mxu0 0.0
        %915 = vmatprep.subr.mxu0 0.0
        %916 = vmatpush1.xpose.msra.mxu0 0.0
        %917 = vmatprep.subr.mxu0 0.0
        %918 = vmatpush1.xpose.msra.mxu0 0.0
        %919 = vmatprep.subr.mxu0 0.0
        %920 = vmatpush1.xpose.msra.mxu0 0.0
        %921 = vmatprep.subr.mxu0 0.0
        %922 = vmatpush1.xpose.msra.mxu0 0.0
        %923 = vmatprep.subr.mxu0 0.0
        %924 = vmatpush1.xpose.msra.mxu0 0.0
        %925 = vmatprep.subr.mxu0 0.0
        %926 = vmatpush1.xpose.msra.mxu0 0.0
        %927 = vmatprep.subr.mxu0 0.0
        %928 = vmatpush1.xpose.msra.mxu0 0.0
        %929 = vmatprep.subr.mxu0 0.0
        %930 = vmatpush1.xpose.msra.mxu0 0.0
        %931 = vmatprep.subr.mxu0 0.0
        %932 = vmatpush1.xpose.msra.mxu0 0.0
        %933 = vmatprep.subr.mxu0 0.0
        %934 = vmatpush1.xpose.msra.mxu0 %v901
        %935 = vmatprep.subr.mxu0 0.0
        %936 = vmatpush2.xpose.msra.mxu0 0.0
        %937 = vmatprep.subr.mxu0 0.0
        %938 = vmatpush2.xpose.msra.mxu0 0.0
        %939 = vmatprep.subr.mxu0 0.0
        %940 = vmatpush2.xpose.msra.mxu0 0.0
        %941 = vmatprep.subr.mxu0 0.0
        %942 = vmatpush2.xpose.msra.mxu0 0.0
        %943 = vmatprep.subr.mxu0 0.0
        %944 = vmatpush2.xpose.msra.mxu0 0.0
        %945 = vmatprep.subr.mxu0 0.0
        %946 = vmatpush2.xpose.msra.mxu0 0.0
        %947 = vmatprep.subr.mxu0 0.0
        %948 = vmatpush2.xpose.msra.mxu0 0.0
        %949 = vmatprep.subr.mxu0 0.0
        %950 = vmatpush2.xpose.msra.mxu0 0.0
        %951 = vmatprep.subr.mxu0 0.0
        %952 = vmatpush2.xpose.msra.mxu0 0.0
        %953 = vmatprep.subr.mxu0 0.0
        %954 = vmatpush2.xpose.msra.mxu0 0.0
        %955 = vmatprep.subr.mxu0 0.0
        %956 = vmatpush2.xpose.msra.mxu0 0.0
        %957 = vmatprep.subr.mxu0 0.0
        %958 = vmatpush2.xpose.msra.mxu0 0.0
        %959 = vmatprep.subr.mxu0 0.0
        %960 = vmatpush2.xpose.msra.mxu0 0.0
        %961 = vmatprep.subr.mxu0 0.0
        %962 = vmatpush2.xpose.msra.mxu0 0.0
        %963 = vmatprep.subr.mxu0 0.0
        %964 = vmatpush2.xpose.msra.mxu0 0.0
        %965 = vmatprep.subr.mxu0 0.0
        %966 = vmatpush2.xpose.msra.mxu0 0.0
        %967 = vmatprep.mubr.f32.mxu0 0.0
        %968 = vmatmul.mubr.f32.gmra.mxu0 %v899
        %v969 = vpop.f32.mrf.mxu0
        %v970 = vadd.f32 0.0, %v969
        %v971 = vpop.f32.mrf.mxu0
        %972 = vdwg.mxu0
        %v973 = vsel %vm567, %v970, -inf
        %974 = vmax.xlane.f32.xlu0 %v973
        %v975 = vpop.xlane.xlu0 %974
        %v976 = vsub.f32 %v970, %v975
        %v977 = vmul.f32 %v976, 1.442695
        %v978 = vpow.pop %v977
        %v979 = vsel %vm567, %v978, 0.0
        %980 = vadd.xlane.f32.xlu0 %v979
        %v981 = vpop.xlane.xlu0 %980
        %983 = vrot.lane.b32.xlu0 %v862, 96
        %v984 = vpop.permute.xlu0 %983
        %v987 = vsel %vm567, %v978, 0
        %989 = vmatprep.subr.mxu0 0.0
        %990 = vmatpush1.msra.mxu0 0.0
        %991 = vmatprep.subr.mxu0 0.0
        %992 = vmatpush1.msra.mxu0 0.0
        %993 = vmatprep.subr.mxu0 0.0
        %994 = vmatpush1.msra.mxu0 0.0
        %995 = vmatprep.subr.mxu0 0.0
        %996 = vmatpush1.msra.mxu0 0.0
        %997 = vmatprep.subr.mxu0 0.0
        %998 = vmatpush1.msra.mxu0 0.0
        %999 = vmatprep.subr.mxu0 0.0
        %1000 = vmatpush1.msra.mxu0 0.0
        %1001 = vmatprep.subr.mxu0 0.0
        %1002 = vmatpush1.msra.mxu0 0.0
        %1003 = vmatprep.subr.mxu0 0.0
        %1004 = vmatpush1.msra.mxu0 0.0
        %1005 = vmatprep.subr.mxu0 0.0
        %1006 = vmatpush1.msra.mxu0 0.0
        %1007 = vmatprep.subr.mxu0 0.0
        %1008 = vmatpush1.msra.mxu0 0.0
        %1009 = vmatprep.subr.mxu0 0.0
        %1010 = vmatpush1.msra.mxu0 0.0
        %1011 = vmatprep.subr.mxu0 0.0
        %1012 = vmatpush1.msra.mxu0 0.0
        %1013 = vmatprep.subr.mxu0 0.0
        %1014 = vmatpush1.msra.mxu0 0.0
        %1015 = vmatprep.subr.mxu0 0.0
        %1016 = vmatpush1.msra.mxu0 0.0
        %1017 = vmatprep.subr.mxu0 0.0
        %1018 = vmatpush1.msra.mxu0 0.0
        %1019 = vmatprep.subr.mxu0 0.0
        %1020 = vmatpush1.msra.mxu0 %v984
        %1021 = vmatprep.subr.mxu0 0.0
        %1022 = vmatpush2.msra.mxu0 0.0
        %1023 = vmatprep.subr.mxu0 0.0
        %1024 = vmatpush2.msra.mxu0 0.0
        %1025 = vmatprep.subr.mxu0 0.0
        %1026 = vmatpush2.msra.mxu0 0.0
        %1027 = vmatprep.subr.mxu0 0.0
        %1028 = vmatpush2.msra.mxu0 0.0
        %1029 = vmatprep.subr.mxu0 0.0
        %1030 = vmatpush2.msra.mxu0 0.0
        %1031 = vmatprep.subr.mxu0 0.0
        %1032 = vmatpush2.msra.mxu0 0.0
        %1033 = vmatprep.subr.mxu0 0.0
        %1034 = vmatpush2.msra.mxu0 0.0
        %1035 = vmatprep.subr.mxu0 0.0
        %1036 = vmatpush2.msra.mxu0 0.0
        %1037 = vmatprep.subr.mxu0 0.0
        %1038 = vmatpush2.msra.mxu0 0.0
        %1039 = vmatprep.subr.mxu0 0.0
        %1040 = vmatpush2.msra.mxu0 0.0
        %1041 = vmatprep.subr.mxu0 0.0
        %1042 = vmatpush2.msra.mxu0 0.0
        %1043 = vmatprep.subr.mxu0 0.0
        %1044 = vmatpush2.msra.mxu0 0.0
        %1045 = vmatprep.subr.mxu0 0.0
        %1046 = vmatpush2.msra.mxu0 0.0
        %1047 = vmatprep.subr.mxu0 0.0
        %1048 = vmatpush2.msra.mxu0 0.0
        %1049 = vmatprep.subr.mxu0 0.0
        %1050 = vmatpush2.msra.mxu0 0.0
        %1051 = vmatprep.subr.mxu0 0.0
        %1052 = vmatpush2.msra.mxu0 0.0
        %1053 = vmatprep.mubr.f32.mxu0 0.0
        %1054 = vmatmul.mubr.f32.gmra.mxu0 %v987
        %v1055 = vpop.f32.mrf.mxu0
        %v1056 = vadd.f32 0.0, %v1055
        %v1057 = vpop.f32.mrf.mxu0
        %1058 = vdwg.mxu0
        %v1059 = vrcp.pop %v981
        %v1060 = vmul.f32 %v1056, %v1059
        %1062 = vrot.lane.b32.xlu0 %v1060, 32
        %v1063 = vpop.permute.xlu0 %1062
        %vm1065 = vcmask 392448
        %1066 = vst.msk [vmem:[#allocation5] sm:$0xff] %vm1065, %v1063
        %v1067 = vld [vmem:[#allocation2] sm:$0xff]
        %v1068 = vld [vmem:[#allocation3] sm:$0xff]
        %v1069 = vld [vmem:[#allocation4] sm:$0xff]
        %v1070 = vmul.f32 %v1067, %v1067
        %1072 = vrot.lane.b32.xlu0 %v1070, 80
        %v1073 = vpop.permute.xlu0 %1072
        %v1075 = vsel %vm463, %v1073, 0.0
        %1076 = vadd.xlane.f32.xlu0 %v1075
        %v1077 = vpop.xlane.xlu0 %1076
        %v1078 = vmax.f32 %v1077, 1e-24
        %v1079 = vrsqrt.pop %v1078
        %v1080 = vmul.f32 %v1068, %v1068
        %1082 = vrot.lane.b32.xlu0 %v1080, 80
        %v1083 = vpop.permute.xlu0 %1082
        %v1085 = vsel %vm463, %v1083, 0.0
        %1086 = vadd.xlane.f32.xlu0 %v1085
        %v1087 = vpop.xlane.xlu0 %1086
        %v1088 = vmax.f32 %v1087, 1e-24
        %v1089 = vrsqrt.pop %v1088
        %v1090 = vmul.f32 %v1067, %v1079
        %1091 = vrot.lane.b32.xlu0 %v480, 48
        %v1092 = vpop.permute.xlu0 %1091
        %v1094 = vmul.f32 %v1090, %v1092
        %v1095 = vmul.f32 %v1068, %v1089
        %1096 = vrot.lane.b32.xlu0 %v488, 48
        %v1097 = vpop.permute.xlu0 %1096
        %v1099 = vmul.f32 %v1095, %v1097
        %1101 = vrot.lane.b32.xlu0 %v1094, 80
        %v1102 = vpop.permute.xlu0 %1101
        %1104 = vrot.lane.b32.xlu0 %v1099, 80
        %v1105 = vpop.permute.xlu0 %1104
        %v1106 = vsel %vm463, %v1102, 0
        %v1108 = vsel %vm463, %v1105, 0
        %1110 = vmatprep.subr.mxu0 0.0
        %1111 = vmatpush1.xpose.msra.mxu0 0.0
        %1112 = vmatprep.subr.mxu0 0.0
        %1113 = vmatpush1.xpose.msra.mxu0 0.0
        %1114 = vmatprep.subr.mxu0 0.0
        %1115 = vmatpush1.xpose.msra.mxu0 0.0
        %1116 = vmatprep.subr.mxu0 0.0
        %1117 = vmatpush1.xpose.msra.mxu0 0.0
        %1118 = vmatprep.subr.mxu0 0.0
        %1119 = vmatpush1.xpose.msra.mxu0 0.0
        %1120 = vmatprep.subr.mxu0 0.0
        %1121 = vmatpush1.xpose.msra.mxu0 0.0
        %1122 = vmatprep.subr.mxu0 0.0
        %1123 = vmatpush1.xpose.msra.mxu0 0.0
        %1124 = vmatprep.subr.mxu0 0.0
        %1125 = vmatpush1.xpose.msra.mxu0 0.0
        %1126 = vmatprep.subr.mxu0 0.0
        %1127 = vmatpush1.xpose.msra.mxu0 0.0
        %1128 = vmatprep.subr.mxu0 0.0
        %1129 = vmatpush1.xpose.msra.mxu0 0.0
        %1130 = vmatprep.subr.mxu0 0.0
        %1131 = vmatpush1.xpose.msra.mxu0 0.0
        %1132 = vmatprep.subr.mxu0 0.0
        %1133 = vmatpush1.xpose.msra.mxu0 0.0
        %1134 = vmatprep.subr.mxu0 0.0
        %1135 = vmatpush1.xpose.msra.mxu0 0.0
        %1136 = vmatprep.subr.mxu0 0.0
        %1137 = vmatpush1.xpose.msra.mxu0 0.0
        %1138 = vmatprep.subr.mxu0 0.0
        %1139 = vmatpush1.xpose.msra.mxu0 0.0
        %1140 = vmatprep.subr.mxu0 0.0
        %1141 = vmatpush1.xpose.msra.mxu0 %v1108
        %1142 = vmatprep.subr.mxu0 0.0
        %1143 = vmatpush2.xpose.msra.mxu0 0.0
        %1144 = vmatprep.subr.mxu0 0.0
        %1145 = vmatpush2.xpose.msra.mxu0 0.0
        %1146 = vmatprep.subr.mxu0 0.0
        %1147 = vmatpush2.xpose.msra.mxu0 0.0
        %1148 = vmatprep.subr.mxu0 0.0
        %1149 = vmatpush2.xpose.msra.mxu0 0.0
        %1150 = vmatprep.subr.mxu0 0.0
        %1151 = vmatpush2.xpose.msra.mxu0 0.0
        %1152 = vmatprep.subr.mxu0 0.0
        %1153 = vmatpush2.xpose.msra.mxu0 0.0
        %1154 = vmatprep.subr.mxu0 0.0
        %1155 = vmatpush2.xpose.msra.mxu0 0.0
        %1156 = vmatprep.subr.mxu0 0.0
        %1157 = vmatpush2.xpose.msra.mxu0 0.0
        %1158 = vmatprep.subr.mxu0 0.0
        %1159 = vmatpush2.xpose.msra.mxu0 0.0
        %1160 = vmatprep.subr.mxu0 0.0
        %1161 = vmatpush2.xpose.msra.mxu0 0.0
        %1162 = vmatprep.subr.mxu0 0.0
        %1163 = vmatpush2.xpose.msra.mxu0 0.0
        %1164 = vmatprep.subr.mxu0 0.0
        %1165 = vmatpush2.xpose.msra.mxu0 0.0
        %1166 = vmatprep.subr.mxu0 0.0
        %1167 = vmatpush2.xpose.msra.mxu0 0.0
        %1168 = vmatprep.subr.mxu0 0.0
        %1169 = vmatpush2.xpose.msra.mxu0 0.0
        %1170 = vmatprep.subr.mxu0 0.0
        %1171 = vmatpush2.xpose.msra.mxu0 0.0
        %1172 = vmatprep.subr.mxu0 0.0
        %1173 = vmatpush2.xpose.msra.mxu0 0.0
        %1174 = vmatprep.mubr.f32.mxu0 0.0
        %1175 = vmatmul.mubr.f32.gmra.mxu0 %v1106
        %v1176 = vpop.f32.mrf.mxu0
        %v1177 = vadd.f32 0.0, %v1176
        %v1178 = vpop.f32.mrf.mxu0
        %1179 = vdwg.mxu0
        %v1180 = vsel %vm567, %v1177, -inf
        %1181 = vmax.xlane.f32.xlu0 %v1180
        %v1182 = vpop.xlane.xlu0 %1181
        %v1183 = vsub.f32 %v1177, %v1182
        %v1184 = vmul.f32 %v1183, 1.442695
        %v1185 = vpow.pop %v1184
        %v1186 = vsel %vm567, %v1185, 0.0
        %1187 = vadd.xlane.f32.xlu0 %v1186
        %v1188 = vpop.xlane.xlu0 %1187
        %1190 = vrot.lane.b32.xlu0 %v1069, 80
        %v1191 = vpop.permute.xlu0 %1190
        %v1194 = vsel %vm567, %v1185, 0
        %1196 = vmatprep.subr.mxu0 0.0
        %1197 = vmatpush1.msra.mxu0 0.0
        %1198 = vmatprep.subr.mxu0 0.0
        %1199 = vmatpush1.msra.mxu0 0.0
        %1200 = vmatprep.subr.mxu0 0.0
        %1201 = vmatpush1.msra.mxu0 0.0
        %1202 = vmatprep.subr.mxu0 0.0
        %1203 = vmatpush1.msra.mxu0 0.0
        %1204 = vmatprep.subr.mxu0 0.0
        %1205 = vmatpush1.msra.mxu0 0.0
        %1206 = vmatprep.subr.mxu0 0.0
        %1207 = vmatpush1.msra.mxu0 0.0
        %1208 = vmatprep.subr.mxu0 0.0
        %1209 = vmatpush1.msra.mxu0 0.0
        %1210 = vmatprep.subr.mxu0 0.0
        %1211 = vmatpush1.msra.mxu0 0.0
        %1212 = vmatprep.subr.mxu0 0.0
        %1213 = vmatpush1.msra.mxu0 0.0
        %1214 = vmatprep.subr.mxu0 0.0
        %1215 = vmatpush1.msra.mxu0 0.0
        %1216 = vmatprep.subr.mxu0 0.0
        %1217 = vmatpush1.msra.mxu0 0.0
        %1218 = vmatprep.subr.mxu0 0.0
        %1219 = vmatpush1.msra.mxu0 0.0
        %1220 = vmatprep.subr.mxu0 0.0
        %1221 = vmatpush1.msra.mxu0 0.0
        %1222 = vmatprep.subr.mxu0 0.0
        %1223 = vmatpush1.msra.mxu0 0.0
        %1224 = vmatprep.subr.mxu0 0.0
        %1225 = vmatpush1.msra.mxu0 0.0
        %1226 = vmatprep.subr.mxu0 0.0
        %1227 = vmatpush1.msra.mxu0 %v1191
        %1228 = vmatprep.subr.mxu0 0.0
        %1229 = vmatpush2.msra.mxu0 0.0
        %1230 = vmatprep.subr.mxu0 0.0
        %1231 = vmatpush2.msra.mxu0 0.0
        %1232 = vmatprep.subr.mxu0 0.0
        %1233 = vmatpush2.msra.mxu0 0.0
        %1234 = vmatprep.subr.mxu0 0.0
        %1235 = vmatpush2.msra.mxu0 0.0
        %1236 = vmatprep.subr.mxu0 0.0
        %1237 = vmatpush2.msra.mxu0 0.0
        %1238 = vmatprep.subr.mxu0 0.0
        %1239 = vmatpush2.msra.mxu0 0.0
        %1240 = vmatprep.subr.mxu0 0.0
        %1241 = vmatpush2.msra.mxu0 0.0
        %1242 = vmatprep.subr.mxu0 0.0
        %1243 = vmatpush2.msra.mxu0 0.0
        %1244 = vmatprep.subr.mxu0 0.0
        %1245 = vmatpush2.msra.mxu0 0.0
        %1246 = vmatprep.subr.mxu0 0.0
        %1247 = vmatpush2.msra.mxu0 0.0
        %1248 = vmatprep.subr.mxu0 0.0
        %1249 = vmatpush2.msra.mxu0 0.0
        %1250 = vmatprep.subr.mxu0 0.0
        %1251 = vmatpush2.msra.mxu0 0.0
        %1252 = vmatprep.subr.mxu0 0.0
        %1253 = vmatpush2.msra.mxu0 0.0
        %1254 = vmatprep.subr.mxu0 0.0
        %1255 = vmatpush2.msra.mxu0 0.0
        %1256 = vmatprep.subr.mxu0 0.0
        %1257 = vmatpush2.msra.mxu0 0.0
        %1258 = vmatprep.subr.mxu0 0.0
        %1259 = vmatpush2.msra.mxu0 0.0
        %1260 = vmatprep.mubr.f32.mxu0 0.0
        %1261 = vmatmul.mubr.f32.gmra.mxu0 %v1194
        %v1262 = vpop.f32.mrf.mxu0
        %v1263 = vadd.f32 0.0, %v1262
        %v1264 = vpop.f32.mrf.mxu0
        %1265 = vdwg.mxu0
        %v1266 = vrcp.pop %v1188
        %v1267 = vmul.f32 %v1263, %v1266
        %1269 = vrot.lane.b32.xlu0 %v1267, 48
        %v1270 = vpop.permute.xlu0 %1269
        %vm1272 = vcmask 523648
        %1273 = vst.msk [vmem:[#allocation5] sm:$0xff] %vm1272, %v1270
        %v1274 = vld [vmem:[#allocation5] sm:$0xff]
        %v1275 = vld [vmem:[%s6] sm:$0xff]
        %v1276 = vld [vmem:[%s6 + $0x8] sm:$0xff]
        %v1277 = vld [vmem:[%s6 + $0x10] sm:$0xff]
        %v1278 = vld [vmem:[%s6 + $0x18] sm:$0xff]
        %v1279 = vld [vmem:[%s6 + $0x20] sm:$0xff]
        %v1280 = vld [vmem:[%s6 + $0x28] sm:$0xff]
        %v1281 = vld [vmem:[%s6 + $0x30] sm:$0xff]
        %v1282 = vld [vmem:[%s6 + $0x38] sm:$0xff]
        %v1284 = vsel %vm449, %v1274, 0
        %1286 = vmatprep.subr.mxu0 0.0
        %1287 = vmatpush1.msra.mxu0 0.0
        %1288 = vmatprep.subr.mxu0 0.0
        %1289 = vmatpush1.msra.mxu0 0.0
        %1290 = vmatprep.subr.mxu0 0.0
        %1291 = vmatpush1.msra.mxu0 0.0
        %1292 = vmatprep.subr.mxu0 0.0
        %1293 = vmatpush1.msra.mxu0 0.0
        %1294 = vmatprep.subr.mxu0 0.0
        %1295 = vmatpush1.msra.mxu0 0.0
        %1296 = vmatprep.subr.mxu0 0.0
        %1297 = vmatpush1.msra.mxu0 0.0
        %1298 = vmatprep.subr.mxu0 0.0
        %1299 = vmatpush1.msra.mxu0 0.0
        %1300 = vmatprep.subr.mxu0 0.0
        %1301 = vmatpush1.msra.mxu0 0.0
        %1302 = vmatprep.subr.mxu0 0.0
        %1303 = vmatpush1.msra.mxu0 %v1282
        %1304 = vmatprep.subr.mxu0 0.0
        %1305 = vmatpush1.msra.mxu0 %v1281
        %1306 = vmatprep.subr.mxu0 0.0
        %1307 = vmatpush1.msra.mxu0 %v1280
        %1308 = vmatprep.subr.mxu0 0.0
        %1309 = vmatpush1.msra.mxu0 %v1279
        %1310 = vmatprep.subr.mxu0 0.0
        %1311 = vmatpush1.msra.mxu0 %v1278
        %1312 = vmatprep.subr.mxu0 0.0
        %1313 = vmatpush1.msra.mxu0 %v1277
        %1314 = vmatprep.subr.mxu0 0.0
        %1315 = vmatpush1.msra.mxu0 %v1276
        %1316 = vmatprep.subr.mxu0 0.0
        %1317 = vmatpush1.msra.mxu0 %v1275
        %1318 = vmatprep.subr.mxu0 0.0
        %1319 = vmatpush2.msra.mxu0 0.0
        %1320 = vmatprep.subr.mxu0 0.0
        %1321 = vmatpush2.msra.mxu0 0.0
        %1322 = vmatprep.subr.mxu0 0.0
        %1323 = vmatpush2.msra.mxu0 0.0
        %1324 = vmatprep.subr.mxu0 0.0
        %1325 = vmatpush2.msra.mxu0 0.0
        %1326 = vmatprep.subr.mxu0 0.0
        %1327 = vmatpush2.msra.mxu0 0.0
        %1328 = vmatprep.subr.mxu0 0.0
        %1329 = vmatpush2.msra.mxu0 0.0
        %1330 = vmatprep.subr.mxu0 0.0
        %1331 = vmatpush2.msra.mxu0 0.0
        %1332 = vmatprep.subr.mxu0 0.0
        %1333 = vmatpush2.msra.mxu0 0.0
        %1334 = vmatprep.subr.mxu0 0.0
        %1335 = vmatpush2.msra.mxu0 0.0
        %1336 = vmatprep.subr.mxu0 0.0
        %1337 = vmatpush2.msra.mxu0 0.0
        %1338 = vmatprep.subr.mxu0 0.0
        %1339 = vmatpush2.msra.mxu0 0.0
        %1340 = vmatprep.subr.mxu0 0.0
        %1341 = vmatpush2.msra.mxu0 0.0
        %1342 = vmatprep.subr.mxu0 0.0
        %1343 = vmatpush2.msra.mxu0 0.0
        %1344 = vmatprep.subr.mxu0 0.0
        %1345 = vmatpush2.msra.mxu0 0.0
        %1346 = vmatprep.subr.mxu0 0.0
        %1347 = vmatpush2.msra.mxu0 0.0
        %1348 = vmatprep.subr.mxu0 0.0
        %1349 = vmatpush2.msra.mxu0 0.0
        %1350 = vmatprep.mubr.f32.mxu0 0.0
        %1351 = vmatmul.mubr.f32.gmra.mxu0 %v1284
        %v1352 = vpop.f32.mrf.mxu0
        %v1353 = vadd.f32 0.0, %v1352
        %v1354 = vpop.f32.mrf.mxu0
        %1355 = vdwg.mxu0
        %1356 = vst.msk [vmem:[%s269] sm:$0xff] %vm275, %v1353
        %s1357 = sand.u32 %s181, 1
        %s1358 = scalar_lea.sflag [#allocation7], %s1357
        %s1359 = sand.u32 %s181, 1
        %s1360 = smul.addr %s1359, 8
        %s1361 = scalar_lea.vmem [#allocation6], %s1360
        // Predicated region
        $region49: #{tpu_custom_call.1} parent=47 // pred_check
          %p1362 = pneg %p191
        $region50: #{tpu_custom_call.1} parent=47 // pred_check_branch
          %1364 = sbr.rel (%p1362) target = $region52
        $region51: #{tpu_custom_call.1} parent=47 // pred_region
          %s1366 = ssub.s32 128, 128
          %1367 = vsyncadd %s1358, %s1366
          %s1368 = smul.addr %s21, 128
          %s1369 = scalar_lea.hbm %s7, %s1368
          %s1371 = sshll.u32 %s1361, 4
          %s1372 = int_to_ptr.vmem [resolvable:$true] %s1371
          %1374 = dma.vmem_to_hbm [thread:$0]  %s1372, 128, %s1369, %s1358
        $region52: #{tpu_custom_call.1} parent=47 // pred_fallthru
          _
      $region48: #{tpu_custom_call.1} parent=5 // pred_fallthru
        _
      %p1375 = scmp.le.s32.totalorder 2, %s16
      // Predicated region
      $region53: #{tpu_custom_call.1} parent=5 // pred_check
        %p1376 = pneg %p1375
      $region54: #{tpu_custom_call.1} parent=5 // pred_check_branch
        %1378 = sbr.rel (%p1376) target = $region56
      $region55: #{tpu_custom_call.1} parent=5 // pred_region
        %s1379 = ssub.s32 %s16, 2
        // Predicated region
        $region57: #{tpu_custom_call.1} parent=55 // pred_check
          %p1380 = pneg %p197
        $region58: #{tpu_custom_call.1} parent=55 // pred_check_branch
          %1382 = sbr.rel (%p1380) target = $region60
        $region59: #{tpu_custom_call.1} parent=55 // pred_region
          %s1383 = sand.u32 %s182, 1
          %s1384 = scalar_lea.sflag [#allocation7], %s1383
          %s1385 = sand.u32 %s182, 1
          %s1386 = smul.addr %s1385, 8
          %s1387 = scalar_lea.vmem [#allocation6], %s1386
          %1388 = dma.done %s1384, 128
        $region60: #{tpu_custom_call.1} parent=55 // pred_fallthru
          _
      $region56: #{tpu_custom_call.1} parent=5 // pred_fallthru
        _
    $region6: #{tpu_custom_call.1} parent=1 // loop_footer
      %s20 = sadd.s32 1, %s16
    $region7: #{tpu_custom_call.1} parent=1 // loop_footer_branch
      %15 = sbr.rel target = $region3
    $region8: #{tpu_custom_call.1} parent=1 // loop_exit
      _
    %1389 = vsyncpa [#allocation7], 1
    %s1390 = scalar_lea.sflag [#allocation7], 1
    %1391 = vsyncpa %s1390, 1

</llo_original>
